<compile_context>
chip_gen: v6e
topology: v6e:2x2x1
jax: 0.10.0
libtpu: 0.0.40
codegen_flags: <defaults>
</compile_context>

<pallas_src>
import functools

import jax
import jax.numpy as jnp
from jax import lax
from jax.experimental import pallas as pl
from jax.experimental.pallas import tpu as pltpu

KH, KW = 7, 7          # kernel_size=(7, 7)
SCALE = 0.5            # scale=0.5
REDUCE_MEAN = True     # reduce_mean=True
TL_MAX = 4096          # L-tile width: 4 MiB bf16 double-buffer per stream at B_pad=256
NC = 2                 # split the L reduction across NC partial grams (v7x: one per TC;
                       # on 1-TC chips it is just a serial loop with negligible overhead)
# NOTE: the module has no learnable parameters (only config), so no weights to init.


def _round_up(x, m):
    return ((x + m - 1) // m) * m


def _unfold(x, kh, kw):
    """F.unfold(x, kernel_size=(kh, kw), padding=0) -> (N, C*kh*kw, L).  Pure gather."""
    N, C, H, W = x.shape
    Ho, Wo = H - kh + 1, W - kw + 1
    rows = []
    for i in range(kh):
        cols = []
        for j in range(kw):
            cols.append(x[:, :, i:i + Ho, j:j + Wo])        # (N, C, Ho, Wo)
        rows.append(jnp.stack(cols, axis=2))                # (N, C, kw, Ho, Wo)
    patches = jnp.stack(rows, axis=2)                       # (N, C, kh, kw, Ho, Wo)
    return patches.reshape(N, C * kh * kw, Ho * Wo)         # (N, B, L)


def gram_diff_kernel(f1_ref, f2_ref, o_ref, *, s1, s2, inv_b, l2_tiles, l2_half):
    # f1_ref : (1, B_pad, TL)  L-tile of original-image patches (bf16)
    # f2_ref : (1, B_pad, TL)  L-tile of resized-image patches (bf16), clamped index
    # o_ref  : (1, 1, B_pad, B_pad)  this core's partial of s1*G1 - s2*G2, centered (f32)
    c = pl.program_id(1)        # core-split index
    k = pl.program_id(2)        # local reduction step over L-tiles

    @pl.when(k == 0)
    def _init():
        o_ref[...] = jnp.zeros_like(o_ref)

    # gram(original) contribution.  Contraction over the lane (last) dim of both
    # operands is the MXU-preferred layout (same form as flash-attention q @ k^T).
    f1 = f1_ref[0]                                          # (B_pad, TL)
    g1 = lax.dot_general(f1, f1, (((1,), (1,)), ((), ())),
                         preferred_element_type=jnp.float32)
    o_ref[0, 0] += s1 * g1

    # gram(resized) contribution: the resized image has fewer L-tiles; they are split
    # evenly across the core axis and skipped (block index clamped -> no re-DMA) once
    # this core's share is exhausted.
    @pl.when(jnp.logical_and(k < l2_half, c * l2_half + k < l2_tiles))
    def _acc_g2():
        f2 = f2_ref[0]                                      # (B_pad, TL)
        g2 = lax.dot_general(f2, f2, (((1,), (1,)), ((), ())),
                             preferred_element_type=jnp.float32)
        o_ref[0, 0] += (-s2) * g2

    @pl.when(k == pl.num_programs(2) - 1)
    def _finalize():
        if REDUCE_MEAN:
            # Mean-centering over the real B rows via gram identity (linear in G, so it
            # applies to each per-core partial of the scaled difference).  Padded feature
            # rows/cols are exactly zero, so full-axis sums equal real-B sums; the
            # divisor is the real (unpadded) B.
            d = o_ref[0, 0]
            col = jnp.sum(d, axis=0, keepdims=True) * inv_b   # (1, B_pad)
            row = jnp.sum(d, axis=1, keepdims=True) * inv_b   # (B_pad, 1)
            tot = jnp.sum(col, axis=1, keepdims=True) * inv_b  # (1, 1)
            o_ref[0, 0] = d - col - row + tot


@jax.jit
def extract_patches_rec_style_gram(x):
    N, C, H, W = x.shape
    # TODO(synk): `imresize` is defined outside the module; approximated with an
    # antialiased bicubic jax.image.resize at scale=0.5 (MATLAB bicubic differs slightly).
    Hr, Wr = int(H * SCALE), int(W * SCALE)
    x32 = x.astype(jnp.float32)
    x_resized = jax.image.resize(x32, (N, C, Hr, Wr), method="bicubic", antialias=True)

    # TODO(synk): the im2col is still materialized in HBM (~49x raw image bytes, now in
    # bf16 with no extra centering/cast passes); fully fusing it into the kernel (DMA raw
    # image strips, build shifted views in VMEM) is the remaining big win for large images.
    B = C * KH * KW
    f1 = _unfold(x32.astype(jnp.bfloat16), KH, KW)          # (N, B, L1) bf16
    f2 = _unfold(x_resized.astype(jnp.bfloat16), KH, KW)    # (N, B, L2) bf16
    L1, L2 = f1.shape[-1], f2.shape[-1]

    B_pad = _round_up(B, 128)                               # lane-dense output, full MXU tiles
    TL = min(TL_MAX, _round_up(L1, 128))
    L1_pad = _round_up(L1, NC * TL)                         # whole tiles for every core half
    L2_pad = _round_up(L2, TL)
    k_half = L1_pad // (NC * TL)                            # reduction steps per core
    l2_tiles = L2_pad // TL
    l2_half = -(-l2_tiles // NC)                            # ceil: resized tiles per core

    # Zero-padding is exact: padded rows/cols contribute nothing to either gram.
    f1p = jnp.pad(f1, ((0, 0), (0, B_pad - B), (0, L1_pad - L1)))
    f2p = jnp.pad(f2, ((0, 0), (0, B_pad - B), (0, L2_pad - L2)))

    kernel = functools.partial(
        gram_diff_kernel,
        s1=1.0 / (B * L1),                                  # true (unpadded) divisors
        s2=1.0 / (B * L2),
        inv_b=1.0 / B,
        l2_tiles=l2_tiles,
        l2_half=l2_half)

    def f1_map(n, c, k):
        return (n, 0, c * k_half + k)

    def f2_map(n, c, k):
        kk = jnp.minimum(k, l2_half - 1)                    # clamp -> no re-DMA once done
        return (n, 0, jnp.minimum(c * l2_half + kk, l2_tiles - 1))

    # VMEM budget computed from the actual double-buffered blocks + headroom for
    # compiler-internal scratch; kept well below v7x's 64 MiB physical VMEM.
    vmem_limit = (2 * (2 * B_pad * TL * 2)                  # f1 + f2 bf16 L-tiles
                  + 2 * (B_pad * B_pad * 4)                 # f32 output block
                  + (16 << 20))
    vmem_limit = min(vmem_limit, 96 << 20)

    out = pl.pallas_call(
        kernel,
        out_shape=jax.ShapeDtypeStruct((N, NC, B_pad, B_pad), jnp.float32),
        grid_spec=pltpu.PrefetchScalarGridSpec(
            num_scalar_prefetch=0,
            grid=(N, NC, k_half),                           # reduction axis last
            in_specs=[
                pl.BlockSpec((1, B_pad, TL), f1_map),
                pl.BlockSpec((1, B_pad, TL), f2_map),
            ],
            out_specs=pl.BlockSpec((1, 1, B_pad, B_pad), lambda n, c, k: (n, c, 0, 0)),
        ),
        compiler_params=pltpu.CompilerParams(
            dimension_semantics=("parallel", "parallel", "arbitrary"),
            vmem_limit_bytes=vmem_limit),
    )(f1p, f2p)

    # Sum the tiny per-core partial grams, drop padding, flatten(start_dim=1).
    d = jnp.sum(out, axis=1)                                # (N, B_pad, B_pad)
    return d[:, :B, :B].reshape(N, B * B)


if __name__ == "__main__":
    key = jax.random.PRNGKey(0)
    # small shapes consistent with the module: batch=2, channels=4, spatial=16
    x = jax.random.normal(key, (2, 4, 16, 16), dtype=jnp.float32)

    out = extract_patches_rec_style_gram(x)
    jax.block_until_ready(out)

    B = 4 * KH * KW
    assert out.shape == (2, B * B), out.shape
    assert out.dtype == jnp.float32

    # Full-precision reference mirroring the PyTorch module (center-then-gram in f32).
    def ref_gram_diff(xx):
        N, C, H, W = xx.shape
        xr = jax.image.resize(xx.astype(jnp.float32),
                              (N, C, int(H * SCALE), int(W * SCALE)),
                              method="bicubic", antialias=True)

        def gram(img):
            f = _unfold(img.astype(jnp.float32), KH, KW)
            Bv, Lv = f.shape[1], f.shape[2]
            if REDUCE_MEAN:
                f = f - jnp.mean(f, axis=1, keepdims=True)
            return jnp.einsum("nbl,ncl->nbc", f, f, precision="highest") / (Bv * Lv)

        return (gram(xx) - gram(xr)).reshape(N, -1)

    ref = ref_gram_diff(x)
    err = float(jnp.max(jnp.abs(out - ref)))
    # Kernel uses bf16 features with the centering folded into the f32 gram; tolerance
    # covers the bf16 quantization of the raw features.
    assert err < 2e-3, f"max abs diff vs reference: {err}"
    print("KERNEL_OK")
</pallas_src>

<mosaic_0001>
module attributes {stable_mosaic.version = 11 : i64} {
  func.func @gram_diff_kernel(%arg0: i32, %arg1: i32, %arg2: i32, %arg3: memref<1x256x128xbf16, #tpu.memory_space<vmem>>, %arg4: memref<1x256x128xbf16, #tpu.memory_space<vmem>>, %arg5: memref<1x1x256x256xf32, #tpu.memory_space<vmem>>) attributes {dimension_semantics = [#tpu.dimension_semantics<parallel>, #tpu.dimension_semantics<parallel>, #tpu.dimension_semantics<arbitrary>], iteration_bounds = array<i64: 2, 2, 1>, scalar_prefetch = 0 : i64, scratch_operands = 0 : i64, tpu.core_type = #tpu.core_type<tc>, window_params = [{transform_indices = @transform_0, window_bounds = array<i64: 1, 256, 128>}, {transform_indices = @transform_1, window_bounds = array<i64: 1, 256, 128>}, {transform_indices = @transform_2, window_bounds = array<i64: 1, 1, 256, 256>}]} {
    %c0_i32 = arith.constant 0 : i32
    %0 = arith.cmpi eq, %arg2, %c0_i32 : i32
    %1 = arith.extui %0 : i1 to i32
    %c0_i32_0 = arith.constant 0 : i32
    %2 = arith.cmpi ne, %1, %c0_i32_0 : i32
    scf.if %2 {
      %cst_17 = arith.constant 0.000000e+00 : f32
      %24 = vector.broadcast %cst_17 : f32 to vector<1x1x256x256xf32>
      %c0_18 = arith.constant 0 : index
      %c0_19 = arith.constant 0 : index
      %c0_20 = arith.constant 0 : index
      %c0_21 = arith.constant 0 : index
      %25 = vector.load %arg5[%c0_18, %c0_19, %c0_20, %c0_21] : memref<1x1x256x256xf32, #tpu.memory_space<vmem>>, vector<1x1x256x256xf32>
      tpu.vector_store %arg5[%c0_18, %c0_19, %c0_20, %c0_21], %24 {strides = array<i32>} : memref<1x1x256x256xf32, #tpu.memory_space<vmem>>, vector<1x1x256x256xf32>,
    } else {
    }
    %c0 = arith.constant 0 : index
    %c0_1 = arith.constant 0 : index
    %c0_2 = arith.constant 0 : index
    %3 = vector.load %arg3[%c0, %c0_1, %c0_2] : memref<1x256x128xbf16, #tpu.memory_space<vmem>>, vector<1x256x128xbf16>
    %4 = vector.shape_cast %3 : vector<1x256x128xbf16> to vector<256x128xbf16>
    %cst = arith.constant dense<0.000000e+00> : vector<256x256xf32>
    %5 = tpu.matmul %4, %4, %cst {dimension_numbers = #tpu.dot_dimension_numbers<[1], [1], [0], [0], [0, 0, 1, 0], [], []>} : vector<256x128xbf16>, vector<256x128xbf16>, vector<256x256xf32> -> vector<256x256xf32>
    %c0_3 = arith.constant 0 : index
    %c0_4 = arith.constant 0 : index
    %c0_5 = arith.constant 0 : index
    %c0_6 = arith.constant 0 : index
    %6 = vector.load %arg5[%c0_3, %c0_4, %c0_5, %c0_6] : memref<1x1x256x256xf32, #tpu.memory_space<vmem>>, vector<1x1x256x256xf32>
    %7 = vector.shape_cast %6 : vector<1x1x256x256xf32> to vector<256x256xf32>
    %cst_7 = arith.constant 5.10204081E-5 : f32
    %8 = vector.broadcast %cst_7 : f32 to vector<256x256xf32>
    %9 = arith.mulf %8, %5 : vector<256x256xf32>
    %10 = arith.addf %7, %9 : vector<256x256xf32>
    %c0_8 = arith.constant 0 : index
    %c0_9 = arith.constant 0 : index
    %c0_10 = arith.constant 0 : index
    %c0_11 = arith.constant 0 : index
    %11 = vector.load %arg5[%c0_8, %c0_9, %c0_10, %c0_11] : memref<1x1x256x256xf32, #tpu.memory_space<vmem>>, vector<1x1x256x256xf32>
    %12 = vector.shape_cast %11 : vector<1x1x256x256xf32> to vector<256x256xf32>
    %13 = vector.shape_cast %10 : vector<256x256xf32> to vector<1x1x256x256xf32>
    tpu.vector_store %arg5[%c0_8, %c0_9, %c0_10, %c0_11], %13 {strides = array<i32>} : memref<1x1x256x256xf32, #tpu.memory_space<vmem>>, vector<1x1x256x256xf32>,
    %c1_i32 = arith.constant 1 : i32
    %14 = arith.cmpi slt, %arg2, %c1_i32 : i32
    %c1_i32_12 = arith.constant 1 : i32
    %15 = arith.muli %arg1, %c1_i32_12 : i32
    %16 = arith.addi %15, %arg2 : i32
    %c1_i32_13 = arith.constant 1 : i32
    %17 = arith.cmpi slt, %16, %c1_i32_13 : i32
    %18 = arith.andi %14, %17 : i1
    %19 = arith.extui %18 : i1 to i32
    %c0_i32_14 = arith.constant 0 : i32
    %20 = arith.cmpi ne, %19, %c0_i32_14 : i32
    scf.if %20 {
      %c0_17 = arith.constant 0 : index
      %c0_18 = arith.constant 0 : index
      %c0_19 = arith.constant 0 : index
      %24 = vector.load %arg4[%c0_17, %c0_18, %c0_19] : memref<1x256x128xbf16, #tpu.memory_space<vmem>>, vector<1x256x128xbf16>
      %25 = vector.shape_cast %24 : vector<1x256x128xbf16> to vector<256x128xbf16>
      %cst_20 = arith.constant dense<0.000000e+00> : vector<256x256xf32>
      %26 = tpu.matmul %25, %25, %cst_20 {dimension_numbers = #tpu.dot_dimension_numbers<[1], [1], [0], [0], [0, 0, 1, 0], [], []>} : vector<256x128xbf16>, vector<256x128xbf16>, vector<256x256xf32> -> vector<256x256xf32>
      %c0_21 = arith.constant 0 : index
      %c0_22 = arith.constant 0 : index
      %c0_23 = arith.constant 0 : index
      %c0_24 = arith.constant 0 : index
      %27 = vector.load %arg5[%c0_21, %c0_22, %c0_23, %c0_24] : memref<1x1x256x256xf32, #tpu.memory_space<vmem>>, vector<1x1x256x256xf32>
      %28 = vector.shape_cast %27 : vector<1x1x256x256xf32> to vector<256x256xf32>
      %cst_25 = arith.constant -0.00127551018 : f32
      %29 = vector.broadcast %cst_25 : f32 to vector<256x256xf32>
      %30 = arith.mulf %29, %26 : vector<256x256xf32>
      %31 = arith.addf %28, %30 : vector<256x256xf32>
      %c0_26 = arith.constant 0 : index
      %c0_27 = arith.constant 0 : index
      %c0_28 = arith.constant 0 : index
      %c0_29 = arith.constant 0 : index
      %32 = vector.load %arg5[%c0_26, %c0_27, %c0_28, %c0_29] : memref<1x1x256x256xf32, #tpu.memory_space<vmem>>, vector<1x1x256x256xf32>
      %33 = vector.shape_cast %32 : vector<1x1x256x256xf32> to vector<256x256xf32>
      %34 = vector.shape_cast %31 : vector<256x256xf32> to vector<1x1x256x256xf32>
      tpu.vector_store %arg5[%c0_26, %c0_27, %c0_28, %c0_29], %34 {strides = array<i32>} : memref<1x1x256x256xf32, #tpu.memory_space<vmem>>, vector<1x1x256x256xf32>,
    } else {
    }
    %c0_i32_15 = arith.constant 0 : i32
    %21 = arith.cmpi eq, %arg2, %c0_i32_15 : i32
    %22 = arith.extui %21 : i1 to i32
    %c0_i32_16 = arith.constant 0 : i32
    %23 = arith.cmpi ne, %22, %c0_i32_16 : i32
    scf.if %23 {
      %c0_17 = arith.constant 0 : index
      %c0_18 = arith.constant 0 : index
      %c0_19 = arith.constant 0 : index
      %c0_20 = arith.constant 0 : index
      %24 = vector.load %arg5[%c0_17, %c0_18, %c0_19, %c0_20] : memref<1x1x256x256xf32, #tpu.memory_space<vmem>>, vector<1x1x256x256xf32>
      %25 = vector.shape_cast %24 : vector<1x1x256x256xf32> to vector<256x256xf32>
      %cst_21 = arith.constant dense<0.000000e+00> : vector<256xf32>
      %26 = vector.multi_reduction <add>, %25, %cst_21 [0] : vector<256x256xf32> to vector<256xf32>
      %27 = vector.shape_cast %26 : vector<256xf32> to vector<1x256xf32>
      %cst_22 = arith.constant 0.00510204071 : f32
      %28 = vector.broadcast %cst_22 : f32 to vector<1x256xf32>
      %29 = arith.mulf %27, %28 : vector<1x256xf32>
      %cst_23 = arith.constant dense<0.000000e+00> : vector<256xf32>
      %30 = vector.multi_reduction <add>, %25, %cst_23 [1] : vector<256x256xf32> to vector<256xf32>
      %31 = vector.shape_cast %30 : vector<256xf32> to vector<256x1xf32>
      %cst_24 = arith.constant 0.00510204071 : f32
      %32 = vector.broadcast %cst_24 : f32 to vector<256x1xf32>
      %33 = arith.mulf %31, %32 : vector<256x1xf32>
      %cst_25 = arith.constant dense<0.000000e+00> : vector<1xf32>
      %34 = vector.multi_reduction <add>, %29, %cst_25 [1] : vector<1x256xf32> to vector<1xf32>
      %35 = vector.shape_cast %34 : vector<1xf32> to vector<1x1xf32>
      %cst_26 = arith.constant 0.00510204071 : f32
      %36 = vector.broadcast %cst_26 : f32 to vector<1x1xf32>
      %37 = arith.mulf %35, %36 : vector<1x1xf32>
      %38 = vector.broadcast %29 : vector<1x256xf32> to vector<256x256xf32>
      %39 = arith.subf %25, %38 : vector<256x256xf32>
      %40 = vector.broadcast %33 : vector<256x1xf32> to vector<256x256xf32>
      %41 = arith.subf %39, %40 : vector<256x256xf32>
      %42 = vector.broadcast %37 : vector<1x1xf32> to vector<256x256xf32>
      %43 = arith.addf %41, %42 : vector<256x256xf32>
      %c0_27 = arith.constant 0 : index
      %c0_28 = arith.constant 0 : index
      %c0_29 = arith.constant 0 : index
      %c0_30 = arith.constant 0 : index
      %44 = vector.load %arg5[%c0_27, %c0_28, %c0_29, %c0_30] : memref<1x1x256x256xf32, #tpu.memory_space<vmem>>, vector<1x1x256x256xf32>
      %45 = vector.shape_cast %44 : vector<1x1x256x256xf32> to vector<256x256xf32>
      %46 = vector.shape_cast %43 : vector<256x256xf32> to vector<1x1x256x256xf32>
      tpu.vector_store %arg5[%c0_27, %c0_28, %c0_29, %c0_30], %46 {strides = array<i32>} : memref<1x1x256x256xf32, #tpu.memory_space<vmem>>, vector<1x1x256x256xf32>,
    } else {
    }
    return
  }
  func.func @transform_0(%arg0: i32, %arg1: i32, %arg2: i32) -> (i32, i32, i32) {
    %c1_i32 = arith.constant 1 : i32
    %0 = arith.muli %arg1, %c1_i32 : i32
    %1 = arith.addi %0, %arg2 : i32
    %c0_i32 = arith.constant 0 : i32
    %c0_i32_0 = arith.constant 0 : i32
    return %arg0, %c0_i32, %1 : i32, i32, i32
  }
  func.func @transform_1(%arg0: i32, %arg1: i32, %arg2: i32) -> (i32, i32, i32) {
    %c0_i32 = arith.constant 0 : i32
    %0 = arith.minsi %arg2, %c0_i32 : i32
    %c1_i32 = arith.constant 1 : i32
    %1 = arith.muli %arg1, %c1_i32 : i32
    %2 = arith.addi %1, %0 : i32
    %c0_i32_0 = arith.constant 0 : i32
    %3 = arith.minsi %2, %c0_i32_0 : i32
    %c0_i32_1 = arith.constant 0 : i32
    %c0_i32_2 = arith.constant 0 : i32
    return %arg0, %c0_i32_1, %3 : i32, i32, i32
  }
  func.func @transform_2(%arg0: i32, %arg1: i32, %arg2: i32) -> (i32, i32, i32, i32) {
    %c0_i32 = arith.constant 0 : i32
    %c0_i32_0 = arith.constant 0 : i32
    %c0_i32_1 = arith.constant 0 : i32
    return %arg0, %arg1, %c0_i32, %c0_i32_0 : i32, i32, i32, i32
  }
}

</mosaic_0001>

<llo_original>
// kernel: extract_patches_rec_style_gram.1
$region0: #{extract_patches_rec_style_gram.1}
  #allocation0 [shape = 'u32[]', space=smem, size = 0x4, offset = 0x4, fixed_abs, tag = 'smem constant byte address 0x4 - core index']
  #allocation1 [shape = 'u32[144,128]{1,0:T(1,128)}', space=vmem, size = 0x12000, scoped, tag = 'internal scratch']
  %s0 = inlined_call_operand.vmem [shape: bf16[2,256,256], index: 0, kind: input, shape index: {}]
  %s1 = inlined_call_operand.vmem [shape: bf16[2,256,128], index: 1, kind: input, shape index: {}]
  %s2 = inlined_call_operand.vmem [shape: f32[2,2,256,256], index: 2, kind: output, shape index: {}]
  %s3 = sld [smem:[#allocation0]]
  $region94: #{extract_patches_rec_style_gram.1} parent=0
    _
  %s5 = ssub.s32 1, %s3
  %s6 = scalar_select 0, %s5, %s3
  $region1: #{extract_patches_rec_style_gram.1} parent=0
    #allocation2 [shape = 'u8[131072]{0}', space=vmem, size = 0x20000, scoped, tag = 'input window, operand 0']
    loop: start=0, step=1, limit=6
    $region2: #{extract_patches_rec_style_gram.1} parent=1 // loop_pre_header
      _
    $region3: #{extract_patches_rec_style_gram.1} parent=1 // loop_header
      %s8 = sphi 0, %s12
      %p9 = scmp.ge.s32.totalorder %s8, 6
      %s15 = sphi 0, %s34
      %s16 = sphi 0, %s30
      %s17 = sphi 0, %s26
      %s18 = sphi 0, %s15
      %s19 = sphi 0, %s16
      %s20 = sphi 0, %s17
      %s21 = sphi 0, %s18
      %s22 = sphi 0, %s19
      %s23 = sphi 0, %s20
      %s41 = sphi 0, %s43
      %s44 = sphi 0, %s41
      %s45 = sphi 0, %s44
      %s61 = sphi 0, %s45
      %s79 = sphi 0, %s81
      %s82 = sphi 0, %s79
      %s83 = sphi 0, %s82
      %s99 = sphi 0, %s83
      %s107 = sphi 0, %s109
      %s110 = sphi 0, %s107
      %s111 = sphi 0, %s110
      %s127 = sphi 0, %s111
    $region4: #{extract_patches_rec_style_gram.1} parent=1 // loop_header_branch
      %11 = sbr.rel (%p9) target = $region8
    $region5: #{extract_patches_rec_style_gram.1} parent=1 // loop_body
      %s13 = ssub.s32 %s8, 1
      %s14 = ssub.s32 %s8, 2
      %s24 = sadd.s32 1, %s17
      %p25 = scmp.ge.s32.totalorder %s24, 1
      %s26 = scalar_select %p25, 0, %s24
      %s27 = sadd.s32 1, %s16
      %s28 = scalar_select %p25, %s27, %s16
      %p29 = scmp.ge.s32.totalorder %s28, 2
      %s30 = scalar_select %p29, 0, %s28
      %s31 = sadd.s32 1, %s15
      %s32 = scalar_select %p29, %s31, %s15
      %p33 = scmp.ge.s32.totalorder %s32, 2
      %s34 = scalar_select %p33, 0, %s32
      %s35 = sadd.s32 %s16, %s17
      %s36 = sadd.s32 %s30, %s26
      %s37 = ssub.s32 %s15, %s34
      %s38 = ssub.s32 %s35, %s36
      %s39 = sor.u32 %s37, %s38
      %p40 = scmp.eq.s32.totalorder %s39, 0
      %s42 = sadd.s32 %s41, 1
      %s43 = scalar_select %p40, %s41, %s42
      %p46 = pneg %p40
      %p47 = scmp.eq.s32.totalorder %s8, 3
      %p48 = por %p46, %p47
      %p49 = scmp.ne.s32.totalorder %s41, %s44
      %p50 = scmp.eq.s32.totalorder %s8, 0
      %p51 = por %p49, %p50
      %p52 = scmp.ne.s32.totalorder %s41, %s44
      %p53 = scmp.eq.s32.totalorder %s13, 3
      %p54 = por %p52, %p53
      %p55 = scmp.ne.s32.totalorder %s44, %s45
      %p56 = scmp.eq.s32.totalorder %s13, 0
      %p57 = por %p55, %p56
      %p58 = scmp.ne.s32.totalorder %s44, %s45
      %p59 = scmp.eq.s32.totalorder %s14, 3
      %p60 = por %p58, %p59
      %p62 = scmp.ne.s32.totalorder %s45, %s61
      %p63 = scmp.eq.s32.totalorder %s14, 0
      %p64 = por %p62, %p63
      %p65 = scmp.lt.s32.totalorder %s17, 0
      %s66 = scalar_select %p65, %s17, 0
      %s67 = sadd.s32 %s16, %s66
      %p68 = scmp.lt.s32.totalorder %s67, 0
      %s69 = scalar_select %p68, %s67, 0
      %p70 = scmp.lt.s32.totalorder %s26, 0
      %s71 = scalar_select %p70, %s26, 0
      %s72 = sadd.s32 %s30, %s71
      %p73 = scmp.lt.s32.totalorder %s72, 0
      %s74 = scalar_select %p73, %s72, 0
      %s75 = ssub.s32 %s15, %s34
      %s76 = ssub.s32 %s69, %s74
      %s77 = sor.u32 %s75, %s76
      %p78 = scmp.eq.s32.totalorder %s77, 0
      %s80 = sadd.s32 %s79, 1
      %s81 = scalar_select %p78, %s79, %s80
      %p84 = pneg %p78
      %p85 = scmp.eq.s32.totalorder %s8, 3
      %p86 = por %p84, %p85
      %p87 = scmp.ne.s32.totalorder %s79, %s82
      %p88 = scmp.eq.s32.totalorder %s8, 0
      %p89 = por %p87, %p88
      %p90 = scmp.ne.s32.totalorder %s79, %s82
      %p91 = scmp.eq.s32.totalorder %s13, 3
      %p92 = por %p90, %p91
      %p93 = scmp.ne.s32.totalorder %s82, %s83
      %p94 = scmp.eq.s32.totalorder %s13, 0
      %p95 = por %p93, %p94
      %p96 = scmp.ne.s32.totalorder %s82, %s83
      %p97 = scmp.eq.s32.totalorder %s14, 3
      %p98 = por %p96, %p97
      %p100 = scmp.ne.s32.totalorder %s83, %s99
      %p101 = scmp.eq.s32.totalorder %s14, 0
      %p102 = por %p100, %p101
      %s103 = ssub.s32 %s15, %s34
      %s104 = ssub.s32 %s16, %s30
      %s105 = sor.u32 %s103, %s104
      %p106 = scmp.eq.s32.totalorder %s105, 0
      %s108 = sadd.s32 %s107, 1
      %s109 = scalar_select %p106, %s107, %s108
      %p112 = pneg %p106
      %p113 = scmp.eq.s32.totalorder %s8, 3
      %p114 = por %p112, %p113
      %p115 = scmp.ne.s32.totalorder %s107, %s110
      %p116 = scmp.eq.s32.totalorder %s8, 0
      %p117 = por %p115, %p116
      %p118 = scmp.ne.s32.totalorder %s107, %s110
      %p119 = scmp.eq.s32.totalorder %s13, 3
      %p120 = por %p118, %p119
      %p121 = scmp.ne.s32.totalorder %s110, %s111
      %p122 = scmp.eq.s32.totalorder %s13, 0
      %p123 = por %p121, %p122
      %p124 = scmp.ne.s32.totalorder %s110, %s111
      %p125 = scmp.eq.s32.totalorder %s14, 3
      %p126 = por %p124, %p125
      %p128 = scmp.ne.s32.totalorder %s111, %s127
      %p129 = scmp.eq.s32.totalorder %s14, 0
      %p130 = por %p128, %p129
      %p131 = scmp.le.s32.totalorder 1, %s8
      %p132 = scmp.lt.s32.totalorder %s8, 5
      %p133 = pnand %p131, %p132
      %p134 = pneg %p133
      // Predicated region
      $region9: #{extract_patches_rec_style_gram.1} parent=5 // pred_check
        _
      $region10: #{extract_patches_rec_style_gram.1} parent=5 // pred_check_branch
        %136 = sbr.rel (%p133) target = $region12
      $region11: #{extract_patches_rec_style_gram.1} parent=5 // pred_region
        %s137 = ssub.s32 %s8, 1
      $region12: #{extract_patches_rec_style_gram.1} parent=5 // pred_fallthru
        _
      %p138 = scmp.lt.s32.totalorder %s8, 4
      // Predicated region
      $region13: #{extract_patches_rec_style_gram.1} parent=5 // pred_check
        %p139 = pneg %p138
      $region14: #{extract_patches_rec_style_gram.1} parent=5 // pred_check_branch
        %141 = sbr.rel (%p139) target = $region16
      $region15: #{extract_patches_rec_style_gram.1} parent=5 // pred_region
        // Predicated region
        $region17: #{extract_patches_rec_style_gram.1} parent=15 // pred_check
          %p142 = pneg %p51
        $region18: #{extract_patches_rec_style_gram.1} parent=15 // pred_check_branch
          %144 = sbr.rel (%p142) target = $region20
        $region19: #{extract_patches_rec_style_gram.1} parent=15 // pred_region
          %s145 = sand.u32 %s41, 1
          %s146 = sand.u32 %s41, 1
          %s147 = smul.addr %s146, 128
          %s148 = scalar_lea.vmem [#allocation2], %s147
          %s149 = sadd.s32 %s16, %s17
          %s150 = smul.addr %s15, 64
          %s151 = sadd.s32 %s149, %s150
          %s152 = smul.addr %s151, 4
          %s153 = scalar_lea.vmem %s0, %s152
          // Predicated region
          $region21: #{extract_patches_rec_style_gram.1} parent=19 // pred_check
            _
          $region22: #{extract_patches_rec_style_gram.1} parent=19 // pred_check_branch
            %155 = sbr.rel (0) target = $region24
          $region23: #{extract_patches_rec_style_gram.1} parent=19 // pred_region
            // Predicated region
            $region25: #{extract_patches_rec_style_gram.1} parent=23 // pred_check
              _
            $region26: #{extract_patches_rec_style_gram.1} parent=23 // pred_check_branch
              %157 = sbr.rel target = $region28
            $region27: #{extract_patches_rec_style_gram.1} parent=23 // pred_region
              // Predicated region
              $region40: #{extract_patches_rec_style_gram.1} parent=27 // pred_check
                _
              $region41: #{extract_patches_rec_style_gram.1} parent=27 // pred_check_branch
                %235 = sbr.rel (0) target = $region43
              $region42: #{extract_patches_rec_style_gram.1} parent=27 // pred_region
                loop: start=0, step=1, limit=1
                $region44: #{extract_patches_rec_style_gram.1} parent=42 // loop_pre_header
                  _
                $region45: #{extract_patches_rec_style_gram.1} parent=42 // loop_header
                  %s237 = sphi 0, %s241
                  %p238 = scmp.ge.s32.totalorder %s237, 1
                  %s242 = sphi %s153, %s153
                  %s243 = sphi %s148, %s148
                $region46: #{extract_patches_rec_style_gram.1} parent=42 // loop_header_branch
                  %240 = sbr.rel (%p238) target = $region50
                $region47: #{extract_patches_rec_style_gram.1} parent=42 // loop_body
                  _
                $region48: #{extract_patches_rec_style_gram.1} parent=42 // loop_footer
                  %s241 = sadd.s32 1, %s237
                $region49: #{extract_patches_rec_style_gram.1} parent=42 // loop_footer_branch
                  %236 = sbr.rel target = $region45
                $region50: #{extract_patches_rec_style_gram.1} parent=42 // loop_exit
                  _
                %s245 = ssub.s32 16, 1
                loop: start=0, step=1, limit=1
                $region51: #{extract_patches_rec_style_gram.1} parent=42 // loop_pre_header
                  _
                $region52: #{extract_patches_rec_style_gram.1} parent=42 // loop_header
                  %s247 = sphi 0, %s251
                  %p248 = scmp.ge.s32.totalorder %s247, 1
                  %s252 = sphi %s153, %s153
                  %s253 = sphi %s148, %s148
                $region53: #{extract_patches_rec_style_gram.1} parent=42 // loop_header_branch
                  %250 = sbr.rel (%p248) target = $region57
                $region54: #{extract_patches_rec_style_gram.1} parent=42 // loop_body
                  %v254 = vld [vmem:[%s252] sm:%s245]
                  %255 = vst [vmem:[%s253] sm:%s245] %v254
                  %v256 = vld [vmem:[%s252 + $0x8] sm:%s245]
                  %257 = vst [vmem:[%s253 + $0x4] sm:%s245] %v256
                  %v258 = vld [vmem:[%s252 + $0x10] sm:%s245]
                  %259 = vst [vmem:[%s253 + $0x8] sm:%s245] %v258
                  %v260 = vld [vmem:[%s252 + $0x18] sm:%s245]
                  %261 = vst [vmem:[%s253 + $0xc] sm:%s245] %v260
                  %v262 = vld [vmem:[%s252 + $0x20] sm:%s245]
                  %263 = vst [vmem:[%s253 + $0x10] sm:%s245] %v262
                  %v264 = vld [vmem:[%s252 + $0x28] sm:%s245]
                  %265 = vst [vmem:[%s253 + $0x14] sm:%s245] %v264
                  %v266 = vld [vmem:[%s252 + $0x30] sm:%s245]
                  %267 = vst [vmem:[%s253 + $0x18] sm:%s245] %v266
                  %v268 = vld [vmem:[%s252 + $0x38] sm:%s245]
                  %269 = vst [vmem:[%s253 + $0x1c] sm:%s245] %v268
                  %v270 = vld [vmem:[%s252 + $0x40] sm:%s245]
                  %271 = vst [vmem:[%s253 + $0x20] sm:%s245] %v270
                  %v272 = vld [vmem:[%s252 + $0x48] sm:%s245]
                  %273 = vst [vmem:[%s253 + $0x24] sm:%s245] %v272
                  %v274 = vld [vmem:[%s252 + $0x50] sm:%s245]
                  %275 = vst [vmem:[%s253 + $0x28] sm:%s245] %v274
                  %v276 = vld [vmem:[%s252 + $0x58] sm:%s245]
                  %277 = vst [vmem:[%s253 + $0x2c] sm:%s245] %v276
                  %v278 = vld [vmem:[%s252 + $0x60] sm:%s245]
                  %279 = vst [vmem:[%s253 + $0x30] sm:%s245] %v278
                  %v280 = vld [vmem:[%s252 + $0x68] sm:%s245]
                  %281 = vst [vmem:[%s253 + $0x34] sm:%s245] %v280
                  %v282 = vld [vmem:[%s252 + $0x70] sm:%s245]
                  %283 = vst [vmem:[%s253 + $0x38] sm:%s245] %v282
                  %v284 = vld [vmem:[%s252 + $0x78] sm:%s245]
                  %285 = vst [vmem:[%s253 + $0x3c] sm:%s245] %v284
                  %v286 = vld [vmem:[%s252 + $0x80] sm:%s245]
                  %287 = vst [vmem:[%s253 + $0x40] sm:%s245] %v286
                  %v288 = vld [vmem:[%s252 + $0x88] sm:%s245]
                  %289 = vst [vmem:[%s253 + $0x44] sm:%s245] %v288
                  %v290 = vld [vmem:[%s252 + $0x90] sm:%s245]
                  %291 = vst [vmem:[%s253 + $0x48] sm:%s245] %v290
                  %v292 = vld [vmem:[%s252 + $0x98] sm:%s245]
                  %293 = vst [vmem:[%s253 + $0x4c] sm:%s245] %v292
                  %v294 = vld [vmem:[%s252 + $0xa0] sm:%s245]
                  %295 = vst [vmem:[%s253 + $0x50] sm:%s245] %v294
                  %v296 = vld [vmem:[%s252 + $0xa8] sm:%s245]
                  %297 = vst [vmem:[%s253 + $0x54] sm:%s245] %v296
                  %v298 = vld [vmem:[%s252 + $0xb0] sm:%s245]
                  %299 = vst [vmem:[%s253 + $0x58] sm:%s245] %v298
                  %v300 = vld [vmem:[%s252 + $0xb8] sm:%s245]
                  %301 = vst [vmem:[%s253 + $0x5c] sm:%s245] %v300
                  %v302 = vld [vmem:[%s252 + $0xc0] sm:%s245]
                  %303 = vst [vmem:[%s253 + $0x60] sm:%s245] %v302
                  %v304 = vld [vmem:[%s252 + $0xc8] sm:%s245]
                  %305 = vst [vmem:[%s253 + $0x64] sm:%s245] %v304
                  %v306 = vld [vmem:[%s252 + $0xd0] sm:%s245]
                  %307 = vst [vmem:[%s253 + $0x68] sm:%s245] %v306
                  %v308 = vld [vmem:[%s252 + $0xd8] sm:%s245]
                  %309 = vst [vmem:[%s253 + $0x6c] sm:%s245] %v308
                  %v310 = vld [vmem:[%s252 + $0xe0] sm:%s245]
                  %311 = vst [vmem:[%s253 + $0x70] sm:%s245] %v310
                  %v312 = vld [vmem:[%s252 + $0xe8] sm:%s245]
                  %313 = vst [vmem:[%s253 + $0x74] sm:%s245] %v312
                  %v314 = vld [vmem:[%s252 + $0xf0] sm:%s245]
                  %315 = vst [vmem:[%s253 + $0x78] sm:%s245] %v314
                  %v316 = vld [vmem:[%s252 + $0xf8] sm:%s245]
                  %317 = vst [vmem:[%s253 + $0x7c] sm:%s245] %v316
                $region55: #{extract_patches_rec_style_gram.1} parent=42 // loop_footer
                  %s251 = sadd.s32 1, %s247
                $region56: #{extract_patches_rec_style_gram.1} parent=42 // loop_footer_branch
                  %246 = sbr.rel target = $region52
                $region57: #{extract_patches_rec_style_gram.1} parent=42 // loop_exit
                  _
              $region43: #{extract_patches_rec_style_gram.1} parent=27 // pred_fallthru
                _
            $region28: #{extract_patches_rec_style_gram.1} parent=23 // pred_fallthru
              _
            // Predicated region
            $region29: #{extract_patches_rec_style_gram.1} parent=23 // pred_check
              _
            $region30: #{extract_patches_rec_style_gram.1} parent=23 // pred_check_branch
              %159 = sbr.rel (0) target = $region32
            $region31: #{extract_patches_rec_style_gram.1} parent=23 // pred_region
              %s161 = ssub.s32 16, 1
              loop: start=0, step=1, limit=1
              $region33: #{extract_patches_rec_style_gram.1} parent=31 // loop_pre_header
                _
              $region34: #{extract_patches_rec_style_gram.1} parent=31 // loop_header
                %s163 = sphi 0, %s167
                %p164 = scmp.ge.s32.totalorder %s163, 1
                %s168 = sphi %s153, %s153
                %s169 = sphi %s148, %s148
              $region35: #{extract_patches_rec_style_gram.1} parent=31 // loop_header_branch
                %166 = sbr.rel (%p164) target = $region39
              $region36: #{extract_patches_rec_style_gram.1} parent=31 // loop_body
                %v170 = vld [vmem:[%s168] sm:%s161]
                %171 = vst [vmem:[%s169] sm:%s161] %v170
                %v172 = vld [vmem:[%s168 + $0x8] sm:%s161]
                %173 = vst [vmem:[%s169 + $0x4] sm:%s161] %v172
                %v174 = vld [vmem:[%s168 + $0x10] sm:%s161]
                %175 = vst [vmem:[%s169 + $0x8] sm:%s161] %v174
                %v176 = vld [vmem:[%s168 + $0x18] sm:%s161]
                %177 = vst [vmem:[%s169 + $0xc] sm:%s161] %v176
                %v178 = vld [vmem:[%s168 + $0x20] sm:%s161]
                %179 = vst [vmem:[%s169 + $0x10] sm:%s161] %v178
                %v180 = vld [vmem:[%s168 + $0x28] sm:%s161]
                %181 = vst [vmem:[%s169 + $0x14] sm:%s161] %v180
                %v182 = vld [vmem:[%s168 + $0x30] sm:%s161]
                %183 = vst [vmem:[%s169 + $0x18] sm:%s161] %v182
                %v184 = vld [vmem:[%s168 + $0x38] sm:%s161]
                %185 = vst [vmem:[%s169 + $0x1c] sm:%s161] %v184
                %v186 = vld [vmem:[%s168 + $0x40] sm:%s161]
                %187 = vst [vmem:[%s169 + $0x20] sm:%s161] %v186
                %v188 = vld [vmem:[%s168 + $0x48] sm:%s161]
                %189 = vst [vmem:[%s169 + $0x24] sm:%s161] %v188
                %v190 = vld [vmem:[%s168 + $0x50] sm:%s161]
                %191 = vst [vmem:[%s169 + $0x28] sm:%s161] %v190
                %v192 = vld [vmem:[%s168 + $0x58] sm:%s161]
                %193 = vst [vmem:[%s169 + $0x2c] sm:%s161] %v192
                %v194 = vld [vmem:[%s168 + $0x60] sm:%s161]
                %195 = vst [vmem:[%s169 + $0x30] sm:%s161] %v194
                %v196 = vld [vmem:[%s168 + $0x68] sm:%s161]
                %197 = vst [vmem:[%s169 + $0x34] sm:%s161] %v196
                %v198 = vld [vmem:[%s168 + $0x70] sm:%s161]
                %199 = vst [vmem:[%s169 + $0x38] sm:%s161] %v198
                %v200 = vld [vmem:[%s168 + $0x78] sm:%s161]
                %201 = vst [vmem:[%s169 + $0x3c] sm:%s161] %v200
                %v202 = vld [vmem:[%s168 + $0x80] sm:%s161]
                %203 = vst [vmem:[%s169 + $0x40] sm:%s161] %v202
                %v204 = vld [vmem:[%s168 + $0x88] sm:%s161]
                %205 = vst [vmem:[%s169 + $0x44] sm:%s161] %v204
                %v206 = vld [vmem:[%s168 + $0x90] sm:%s161]
                %207 = vst [vmem:[%s169 + $0x48] sm:%s161] %v206
                %v208 = vld [vmem:[%s168 + $0x98] sm:%s161]
                %209 = vst [vmem:[%s169 + $0x4c] sm:%s161] %v208
                %v210 = vld [vmem:[%s168 + $0xa0] sm:%s161]
                %211 = vst [vmem:[%s169 + $0x50] sm:%s161] %v210
                %v212 = vld [vmem:[%s168 + $0xa8] sm:%s161]
                %213 = vst [vmem:[%s169 + $0x54] sm:%s161] %v212
                %v214 = vld [vmem:[%s168 + $0xb0] sm:%s161]
                %215 = vst [vmem:[%s169 + $0x58] sm:%s161] %v214
                %v216 = vld [vmem:[%s168 + $0xb8] sm:%s161]
                %217 = vst [vmem:[%s169 + $0x5c] sm:%s161] %v216
                %v218 = vld [vmem:[%s168 + $0xc0] sm:%s161]
                %219 = vst [vmem:[%s169 + $0x60] sm:%s161] %v218
                %v220 = vld [vmem:[%s168 + $0xc8] sm:%s161]
                %221 = vst [vmem:[%s169 + $0x64] sm:%s161] %v220
                %v222 = vld [vmem:[%s168 + $0xd0] sm:%s161]
                %223 = vst [vmem:[%s169 + $0x68] sm:%s161] %v222
                %v224 = vld [vmem:[%s168 + $0xd8] sm:%s161]
                %225 = vst [vmem:[%s169 + $0x6c] sm:%s161] %v224
                %v226 = vld [vmem:[%s168 + $0xe0] sm:%s161]
                %227 = vst [vmem:[%s169 + $0x70] sm:%s161] %v226
                %v228 = vld [vmem:[%s168 + $0xe8] sm:%s161]
                %229 = vst [vmem:[%s169 + $0x74] sm:%s161] %v228
                %v230 = vld [vmem:[%s168 + $0xf0] sm:%s161]
                %231 = vst [vmem:[%s169 + $0x78] sm:%s161] %v230
                %v232 = vld [vmem:[%s168 + $0xf8] sm:%s161]
                %233 = vst [vmem:[%s169 + $0x7c] sm:%s161] %v232
              $region37: #{extract_patches_rec_style_gram.1} parent=31 // loop_footer
                %s167 = sadd.s32 1, %s163
              $region38: #{extract_patches_rec_style_gram.1} parent=31 // loop_footer_branch
                %162 = sbr.rel target = $region34
              $region39: #{extract_patches_rec_style_gram.1} parent=31 // loop_exit
                _
            $region32: #{extract_patches_rec_style_gram.1} parent=23 // pred_fallthru
              _
          $region24: #{extract_patches_rec_style_gram.1} parent=19 // pred_fallthru
            _
          %318 = vnop
        $region20: #{extract_patches_rec_style_gram.1} parent=15 // pred_fallthru
          _
        // Predicated region
        $region58: #{extract_patches_rec_style_gram.1} parent=15 // pred_check
          %p319 = pneg %p89
        $region59: #{extract_patches_rec_style_gram.1} parent=15 // pred_check_branch
          %321 = sbr.rel (%p319) target = $region61
        $region60: #{extract_patches_rec_style_gram.1} parent=15 // pred_region
          %p322 = scmp.lt.s32.totalorder %s17, 0
          %s323 = scalar_select %p322, %s17, 0
          %s324 = sadd.s32 %s16, %s323
          %p325 = scmp.lt.s32.totalorder %s324, 0
          %s326 = scalar_select %p325, %s324, 0
          %p327 = scmp.lt.s32.totalorder %s15, 1
          %s328 = scalar_select %p327, %s15, 1
          %p329 = scmp.lt.s32.totalorder %s326, 0
          %s330 = scalar_select %p329, %s326, 0
          %s331 = smul.addr %s328, 32
          %s332 = sadd.s32 %s330, %s331
          %s333 = smul.addr %s332, 4
          %s334 = scalar_lea.vmem %s1, %s333
          %p335 = scmp.lt.s32.totalorder %s17, 0
          %s336 = scalar_select %p335, %s17, 0
          %s337 = sadd.s32 %s16, %s336
          %p338 = scmp.lt.s32.totalorder %s337, 0
          %s339 = scalar_select %p338, %s337, 0
        $region61: #{extract_patches_rec_style_gram.1} parent=15 // pred_fallthru
          _
      $region16: #{extract_patches_rec_style_gram.1} parent=5 // pred_fallthru
        _
      %p340 = scmp.le.s32.totalorder 1, %s8
      %p341 = scmp.lt.s32.totalorder %s8, 5
      %p342 = pnand %p340, %p341
      %p343 = pneg %p342
      // Predicated region
      $region62: #{extract_patches_rec_style_gram.1} parent=5 // pred_check
        _
      $region63: #{extract_patches_rec_style_gram.1} parent=5 // pred_check_branch
        %345 = sbr.rel (%p342) target = $region65
      $region64: #{extract_patches_rec_style_gram.1} parent=5 // pred_region
        %s346 = ssub.s32 %s8, 1
        %s347 = sand.u32 %s44, 1
        %s348 = sand.u32 %s44, 1
        %s349 = smul.addr %s348, 128
        %s350 = scalar_lea.vmem [#allocation2], %s349
        // Predicated region
        $region66: #{extract_patches_rec_style_gram.1} parent=64 // pred_check
          %p351 = pneg %p57
        $region67: #{extract_patches_rec_style_gram.1} parent=64 // pred_check_branch
          %353 = sbr.rel (%p351) target = $region69
        $region68: #{extract_patches_rec_style_gram.1} parent=64 // pred_region
          _
        $region69: #{extract_patches_rec_style_gram.1} parent=64 // pred_fallthru
          _
        %s354 = sand.u32 %s44, 1
        %s355 = sand.u32 %s44, 1
        %s356 = smul.addr %s355, 128
        %s357 = scalar_lea.vmem [#allocation2], %s356
        %p358 = pneg %p57
        %p359 = pneg %p54
        %p360 = scmp.lt.s32.totalorder %s20, 0
        %s361 = scalar_select %p360, %s20, 0
        %s362 = sadd.s32 %s19, %s361
        %p363 = scmp.lt.s32.totalorder %s362, 0
        %s364 = scalar_select %p363, %s362, 0
        %p365 = scmp.lt.s32.totalorder %s18, 1
        %s366 = scalar_select %p365, %s18, 1
        %p367 = scmp.lt.s32.totalorder %s364, 0
        %s368 = scalar_select %p367, %s364, 0
        %s369 = smul.addr %s366, 32
        %s370 = sadd.s32 %s368, %s369
        %s371 = smul.addr %s370, 4
        %s372 = scalar_lea.vmem %s1, %s371
        %p373 = pneg %p95
        %p374 = pneg %p92
        %p375 = pneg %p123
        %p376 = pneg %p120
        %p377 = scmp.lt.s32.totalorder %s18, 1
        %s378 = scalar_select %p377, %s18, 1
        %p379 = scmp.lt.s32.totalorder %s19, 1
        %s380 = scalar_select %p379, %s19, 1
        %s381 = smul.addr %s380, 64
        %s382 = smul.addr %s378, 128
        %s383 = sadd.s32 %s381, %s382
        %s384 = smul.addr %s383, 8
        %s385 = scalar_lea.vmem %s2, %s384
        %s386 = sadd.s32 %s19, %s20
        %p387 = scmp.lt.s32.totalorder %s20, 0
        %s388 = scalar_select %p387, %s20, 0
        %s389 = sadd.s32 %s19, %s388
        %p390 = scmp.lt.s32.totalorder %s389, 0
        %s391 = scalar_select %p390, %s389, 0
        %p392 = scmp.lt.s32.totalorder %s18, 1
        %s393 = scalar_select %p392, %s18, 1
        %p394 = scmp.lt.s32.totalorder %s391, 0
        %s395 = scalar_select %p394, %s391, 0
        %s396 = smul.addr %s393, 32
        %s397 = sadd.s32 %s395, %s396
        %s398 = smul.addr %s397, 4
        %s399 = scalar_lea.vmem %s1, %s398
        %p400 = scmp.lt.s32.totalorder %s20, 0
        %s401 = scalar_select %p400, %s20, 0
        %s402 = sadd.s32 %s19, %s401
        %p403 = scmp.lt.s32.totalorder %s402, 0
        %s404 = scalar_select %p403, %s402, 0
        %p405 = scmp.lt.s32.totalorder %s18, 1
        %s406 = scalar_select %p405, %s18, 1
        %p407 = scmp.lt.s32.totalorder %s19, 1
        %s408 = scalar_select %p407, %s19, 1
        %s409 = smul.addr %s408, 64
        %s410 = smul.addr %s406, 128
        %s411 = sadd.s32 %s409, %s410
        %s412 = smul.addr %s411, 8
        %s413 = scalar_lea.vmem %s2, %s412
        %p415 = scmp.eq.s32.totalorder %s20, 0
        // Predicated region
        $region70: #{extract_patches_rec_style_gram.1} parent=64 // pred_check
          %p416 = pneg %p415
        $region71: #{extract_patches_rec_style_gram.1} parent=64 // pred_check_branch
          %418 = sbr.rel (%p416) target = $region73
        $region72: #{extract_patches_rec_style_gram.1} parent=64 // pred_region
          %419 = vst [vmem:[%s413] sm:$0xff] 0.0
          %420 = vst [vmem:[%s413 + $0x8] sm:$0xff] 0.0
          %421 = vst [vmem:[%s413 + $0x10] sm:$0xff] 0.0
          %422 = vst [vmem:[%s413 + $0x18] sm:$0xff] 0.0
          %423 = vst [vmem:[%s413 + $0x20] sm:$0xff] 0.0
          %424 = vst [vmem:[%s413 + $0x28] sm:$0xff] 0.0
          %425 = vst [vmem:[%s413 + $0x30] sm:$0xff] 0.0
          %426 = vst [vmem:[%s413 + $0x38] sm:$0xff] 0.0
          %427 = vst [vmem:[%s413 + $0x40] sm:$0xff] 0.0
          %428 = vst [vmem:[%s413 + $0x48] sm:$0xff] 0.0
          %429 = vst [vmem:[%s413 + $0x50] sm:$0xff] 0.0
          %430 = vst [vmem:[%s413 + $0x58] sm:$0xff] 0.0
          %431 = vst [vmem:[%s413 + $0x60] sm:$0xff] 0.0
          %432 = vst [vmem:[%s413 + $0x68] sm:$0xff] 0.0
          %433 = vst [vmem:[%s413 + $0x70] sm:$0xff] 0.0
          %434 = vst [vmem:[%s413 + $0x78] sm:$0xff] 0.0
          %435 = vst [vmem:[%s413 + $0x80] sm:$0xff] 0.0
          %436 = vst [vmem:[%s413 + $0x88] sm:$0xff] 0.0
          %437 = vst [vmem:[%s413 + $0x90] sm:$0xff] 0.0
          %438 = vst [vmem:[%s413 + $0x98] sm:$0xff] 0.0
          %439 = vst [vmem:[%s413 + $0xa0] sm:$0xff] 0.0
          %440 = vst [vmem:[%s413 + $0xa8] sm:$0xff] 0.0
          %441 = vst [vmem:[%s413 + $0xb0] sm:$0xff] 0.0
          %442 = vst [vmem:[%s413 + $0xb8] sm:$0xff] 0.0
          %443 = vst [vmem:[%s413 + $0xc0] sm:$0xff] 0.0
          %444 = vst [vmem:[%s413 + $0xc8] sm:$0xff] 0.0
          %445 = vst [vmem:[%s413 + $0xd0] sm:$0xff] 0.0
          %446 = vst [vmem:[%s413 + $0xd8] sm:$0xff] 0.0
          %447 = vst [vmem:[%s413 + $0xe0] sm:$0xff] 0.0
          %448 = vst [vmem:[%s413 + $0xe8] sm:$0xff] 0.0
          %449 = vst [vmem:[%s413 + $0xf0] sm:$0xff] 0.0
          %450 = vst [vmem:[%s413 + $0xf8] sm:$0xff] 0.0
          %451 = vst [vmem:[%s413 + $0x100] sm:$0xff] 0.0
          %452 = vst [vmem:[%s413 + $0x108] sm:$0xff] 0.0
          %453 = vst [vmem:[%s413 + $0x110] sm:$0xff] 0.0
          %454 = vst [vmem:[%s413 + $0x118] sm:$0xff] 0.0
          %455 = vst [vmem:[%s413 + $0x120] sm:$0xff] 0.0
          %456 = vst [vmem:[%s413 + $0x128] sm:$0xff] 0.0
          %457 = vst [vmem:[%s413 + $0x130] sm:$0xff] 0.0
          %458 = vst [vmem:[%s413 + $0x138] sm:$0xff] 0.0
          %459 = vst [vmem:[%s413 + $0x140] sm:$0xff] 0.0
          %460 = vst [vmem:[%s413 + $0x148] sm:$0xff] 0.0
          %461 = vst [vmem:[%s413 + $0x150] sm:$0xff] 0.0
          %462 = vst [vmem:[%s413 + $0x158] sm:$0xff] 0.0
          %463 = vst [vmem:[%s413 + $0x160] sm:$0xff] 0.0
          %464 = vst [vmem:[%s413 + $0x168] sm:$0xff] 0.0
          %465 = vst [vmem:[%s413 + $0x170] sm:$0xff] 0.0
          %466 = vst [vmem:[%s413 + $0x178] sm:$0xff] 0.0
          %467 = vst [vmem:[%s413 + $0x180] sm:$0xff] 0.0
          %468 = vst [vmem:[%s413 + $0x188] sm:$0xff] 0.0
          %469 = vst [vmem:[%s413 + $0x190] sm:$0xff] 0.0
          %470 = vst [vmem:[%s413 + $0x198] sm:$0xff] 0.0
          %471 = vst [vmem:[%s413 + $0x1a0] sm:$0xff] 0.0
          %472 = vst [vmem:[%s413 + $0x1a8] sm:$0xff] 0.0
          %473 = vst [vmem:[%s413 + $0x1b0] sm:$0xff] 0.0
          %474 = vst [vmem:[%s413 + $0x1b8] sm:$0xff] 0.0
          %475 = vst [vmem:[%s413 + $0x1c0] sm:$0xff] 0.0
          %476 = vst [vmem:[%s413 + $0x1c8] sm:$0xff] 0.0
          %477 = vst [vmem:[%s413 + $0x1d0] sm:$0xff] 0.0
          %478 = vst [vmem:[%s413 + $0x1d8] sm:$0xff] 0.0
          %479 = vst [vmem:[%s413 + $0x1e0] sm:$0xff] 0.0
          %480 = vst [vmem:[%s413 + $0x1e8] sm:$0xff] 0.0
          %481 = vst [vmem:[%s413 + $0x1f0] sm:$0xff] 0.0
          %482 = vst [vmem:[%s413 + $0x1f8] sm:$0xff] 0.0
        $region73: #{extract_patches_rec_style_gram.1} parent=64 // pred_fallthru
          _
        %v483 = vld [vmem:[%s350] sm:$0xf]
        %v484 = vld [vmem:[%s350 + $0x4] sm:$0xf]
        %v485 = vld [vmem:[%s350 + $0x8] sm:$0xf]
        %v486 = vld [vmem:[%s350 + $0xc] sm:$0xf]
        %v487 = vld [vmem:[%s350 + $0x10] sm:$0xf]
        %v488 = vld [vmem:[%s350 + $0x14] sm:$0xf]
        %v489 = vld [vmem:[%s350 + $0x18] sm:$0xf]
        %v490 = vld [vmem:[%s350 + $0x1c] sm:$0xf]
        %v491 = vld [vmem:[%s350 + $0x20] sm:$0xf]
        %v492 = vld [vmem:[%s350 + $0x24] sm:$0xf]
        %v493 = vld [vmem:[%s350 + $0x28] sm:$0xf]
        %v494 = vld [vmem:[%s350 + $0x2c] sm:$0xf]
        %v495 = vld [vmem:[%s350 + $0x30] sm:$0xf]
        %v496 = vld [vmem:[%s350 + $0x34] sm:$0xf]
        %v497 = vld [vmem:[%s350 + $0x38] sm:$0xf]
        %v498 = vld [vmem:[%s350 + $0x3c] sm:$0xf]
        %v499 = vld [vmem:[%s350 + $0x40] sm:$0xf]
        %v500 = vld [vmem:[%s350 + $0x44] sm:$0xf]
        %v501 = vld [vmem:[%s350 + $0x48] sm:$0xf]
        %v502 = vld [vmem:[%s350 + $0x4c] sm:$0xf]
        %v503 = vld [vmem:[%s350 + $0x50] sm:$0xf]
        %v504 = vld [vmem:[%s350 + $0x54] sm:$0xf]
        %v505 = vld [vmem:[%s350 + $0x58] sm:$0xf]
        %v506 = vld [vmem:[%s350 + $0x5c] sm:$0xf]
        %v507 = vld [vmem:[%s350 + $0x60] sm:$0xf]
        %v508 = vld [vmem:[%s350 + $0x64] sm:$0xf]
        %v509 = vld [vmem:[%s350 + $0x68] sm:$0xf]
        %v510 = vld [vmem:[%s350 + $0x6c] sm:$0xf]
        %v511 = vld [vmem:[%s350 + $0x70] sm:$0xf]
        %v512 = vld [vmem:[%s350 + $0x74] sm:$0xf]
        %v513 = vld [vmem:[%s350 + $0x78] sm:$0xf]
        %v514 = vld [vmem:[%s350 + $0x7c] sm:$0xf]
        %v547 = vunpack.c.l.b16 %v483
        %v548 = vunpack.c.l.b16 %v484
        %v549 = vunpack.c.l.b16 %v485
        %v550 = vunpack.c.l.b16 %v486
        %v551 = vunpack.c.l.b16 %v487
        %v552 = vunpack.c.l.b16 %v488
        %v553 = vunpack.c.l.b16 %v489
        %v554 = vunpack.c.l.b16 %v490
        %v555 = vunpack.c.l.b16 %v491
        %v556 = vunpack.c.l.b16 %v492
        %v557 = vunpack.c.l.b16 %v493
        %v558 = vunpack.c.l.b16 %v494
        %v559 = vunpack.c.l.b16 %v495
        %v560 = vunpack.c.l.b16 %v496
        %v561 = vunpack.c.l.b16 %v497
        %v562 = vunpack.c.l.b16 %v498
        %v563 = vunpack.c.l.b16 %v499
        %v564 = vunpack.c.l.b16 %v500
        %v565 = vunpack.c.l.b16 %v501
        %v566 = vunpack.c.l.b16 %v502
        %v567 = vunpack.c.l.b16 %v503
        %v568 = vunpack.c.l.b16 %v504
        %v569 = vunpack.c.l.b16 %v505
        %v570 = vunpack.c.l.b16 %v506
        %v571 = vunpack.c.l.b16 %v507
        %v572 = vunpack.c.l.b16 %v508
        %v573 = vunpack.c.l.b16 %v509
        %v574 = vunpack.c.l.b16 %v510
        %v575 = vunpack.c.l.b16 %v511
        %v576 = vunpack.c.l.b16 %v512
        %v577 = vunpack.c.l.b16 %v513
        %v578 = vunpack.c.l.b16 %v514
        %v579 = vpack.c.b16 %v548, %v547
        %v580 = vpack.c.b16 %v550, %v549
        %v581 = vpack.c.b16 %v552, %v551
        %v582 = vpack.c.b16 %v554, %v553
        %v583 = vpack.c.b16 %v556, %v555
        %v584 = vpack.c.b16 %v558, %v557
        %v585 = vpack.c.b16 %v560, %v559
        %v586 = vpack.c.b16 %v562, %v561
        %v587 = vpack.c.b16 %v564, %v563
        %v588 = vpack.c.b16 %v566, %v565
        %v589 = vpack.c.b16 %v568, %v567
        %v590 = vpack.c.b16 %v570, %v569
        %v591 = vpack.c.b16 %v572, %v571
        %v592 = vpack.c.b16 %v574, %v573
        %v593 = vpack.c.b16 %v576, %v575
        %v594 = vpack.c.b16 %v578, %v577
        %611 = vmatprep.subr.bf16.mxu0 0
        %612 = vmatpush1.bf16.xpose.msra.mxu0 %v586
        %613 = vmatprep.subr.bf16.mxu0 0
        %614 = vmatpush1.bf16.xpose.msra.mxu0 %v585
        %615 = vmatprep.subr.bf16.mxu0 0
        %616 = vmatpush1.bf16.xpose.msra.mxu0 %v584
        %617 = vmatprep.subr.bf16.mxu0 0
        %618 = vmatpush1.bf16.xpose.msra.mxu0 %v583
        %619 = vmatprep.subr.bf16.mxu0 0
        %620 = vmatpush1.bf16.xpose.msra.mxu0 %v582
        %621 = vmatprep.subr.bf16.mxu0 0
        %622 = vmatpush1.bf16.xpose.msra.mxu0 %v581
        %623 = vmatprep.subr.bf16.mxu0 0
        %624 = vmatpush1.bf16.xpose.msra.mxu0 %v580
        %625 = vmatprep.subr.bf16.mxu0 0
        %626 = vmatpush1.bf16.xpose.msra.mxu0 %v579
        %627 = vmatprep.subr.bf16.mxu0 0
        %628 = vmatpush2.bf16.xpose.msra.mxu0 %v594
        %629 = vmatprep.subr.bf16.mxu0 0
        %630 = vmatpush2.bf16.xpose.msra.mxu0 %v593
        %631 = vmatprep.subr.bf16.mxu0 0
        %632 = vmatpush2.bf16.xpose.msra.mxu0 %v592
        %633 = vmatprep.subr.bf16.mxu0 0
        %634 = vmatpush2.bf16.xpose.msra.mxu0 %v591
        %635 = vmatprep.subr.bf16.mxu0 0
        %636 = vmatpush2.bf16.xpose.msra.mxu0 %v590
        %637 = vmatprep.subr.bf16.mxu0 0
        %638 = vmatpush2.bf16.xpose.msra.mxu0 %v589
        %639 = vmatprep.subr.bf16.mxu0 0
        %640 = vmatpush2.bf16.xpose.msra.mxu0 %v588
        %641 = vmatprep.subr.bf16.mxu0 0
        %642 = vmatpush2.bf16.xpose.msra.mxu0 %v587
        %643 = vmatprep.mubr.bf16.mxu0 0
        %644 = vmatmul.mubr.bf16.gmra.mxu0 %v579
        %v645 = vpop.f32.mrf.mxu0
        %v646 = vadd.f32 0.0, %v645
        %v647 = vpop.f32.mrf.mxu0
        %v648 = vadd.f32 0.0, %v647
        %v649 = vpop.f32.mrf.mxu0
        %v650 = vadd.f32 0.0, %v649
        %v651 = vpop.f32.mrf.mxu0
        %v652 = vadd.f32 0.0, %v651
        %653 = vmatprep.mubr.bf16.mxu0 0
        %654 = vmatmul.mubr.bf16.gmra.mxu0 %v580
        %v655 = vpop.f32.mrf.mxu0
        %v656 = vadd.f32 0.0, %v655
        %v657 = vpop.f32.mrf.mxu0
        %v658 = vadd.f32 0.0, %v657
        %v659 = vpop.f32.mrf.mxu0
        %v660 = vadd.f32 0.0, %v659
        %v661 = vpop.f32.mrf.mxu0
        %v662 = vadd.f32 0.0, %v661
        %663 = vmatprep.mubr.bf16.mxu0 0
        %664 = vmatmul.mubr.bf16.gmra.mxu0 %v581
        %v665 = vpop.f32.mrf.mxu0
        %v666 = vadd.f32 0.0, %v665
        %v667 = vpop.f32.mrf.mxu0
        %v668 = vadd.f32 0.0, %v667
        %v669 = vpop.f32.mrf.mxu0
        %v670 = vadd.f32 0.0, %v669
        %v671 = vpop.f32.mrf.mxu0
        %v672 = vadd.f32 0.0, %v671
        %673 = vmatprep.mubr.bf16.mxu0 0
        %674 = vmatmul.mubr.bf16.gmra.mxu0 %v582
        %v675 = vpop.f32.mrf.mxu0
        %v676 = vadd.f32 0.0, %v675
        %v677 = vpop.f32.mrf.mxu0
        %v678 = vadd.f32 0.0, %v677
        %v679 = vpop.f32.mrf.mxu0
        %v680 = vadd.f32 0.0, %v679
        %v681 = vpop.f32.mrf.mxu0
        %v682 = vadd.f32 0.0, %v681
        %683 = vmatprep.mubr.bf16.mxu0 0
        %684 = vmatmul.mubr.bf16.gmra.mxu0 %v583
        %v685 = vpop.f32.mrf.mxu0
        %v686 = vadd.f32 0.0, %v685
        %v687 = vpop.f32.mrf.mxu0
        %v688 = vadd.f32 0.0, %v687
        %v689 = vpop.f32.mrf.mxu0
        %v690 = vadd.f32 0.0, %v689
        %v691 = vpop.f32.mrf.mxu0
        %v692 = vadd.f32 0.0, %v691
        %693 = vmatprep.mubr.bf16.mxu0 0
        %694 = vmatmul.mubr.bf16.gmra.mxu0 %v584
        %v695 = vpop.f32.mrf.mxu0
        %v696 = vadd.f32 0.0, %v695
        %v697 = vpop.f32.mrf.mxu0
        %v698 = vadd.f32 0.0, %v697
        %v699 = vpop.f32.mrf.mxu0
        %v700 = vadd.f32 0.0, %v699
        %v701 = vpop.f32.mrf.mxu0
        %v702 = vadd.f32 0.0, %v701
        %703 = vmatprep.mubr.bf16.mxu0 0
        %704 = vmatmul.mubr.bf16.gmra.mxu0 %v585
        %v705 = vpop.f32.mrf.mxu0
        %v706 = vadd.f32 0.0, %v705
        %v707 = vpop.f32.mrf.mxu0
        %v708 = vadd.f32 0.0, %v707
        %v709 = vpop.f32.mrf.mxu0
        %v710 = vadd.f32 0.0, %v709
        %v711 = vpop.f32.mrf.mxu0
        %v712 = vadd.f32 0.0, %v711
        %713 = vmatprep.mubr.bf16.mxu0 0
        %714 = vmatmul.mubr.bf16.gmra.mxu0 %v586
        %v715 = vpop.f32.mrf.mxu0
        %v716 = vadd.f32 0.0, %v715
        %v717 = vpop.f32.mrf.mxu0
        %v718 = vadd.f32 0.0, %v717
        %v719 = vpop.f32.mrf.mxu0
        %v720 = vadd.f32 0.0, %v719
        %v721 = vpop.f32.mrf.mxu0
        %v722 = vadd.f32 0.0, %v721
        %723 = vmatprep.mubr.bf16.mxu0 0
        %724 = vmatmul.mubr.bf16.gmra.mxu0 %v587
        %v725 = vpop.f32.mrf.mxu0
        %v726 = vadd.f32 0.0, %v725
        %v727 = vpop.f32.mrf.mxu0
        %v728 = vadd.f32 0.0, %v727
        %v729 = vpop.f32.mrf.mxu0
        %v730 = vadd.f32 0.0, %v729
        %v731 = vpop.f32.mrf.mxu0
        %v732 = vadd.f32 0.0, %v731
        %733 = vmatprep.mubr.bf16.mxu0 0
        %734 = vmatmul.mubr.bf16.gmra.mxu0 %v588
        %v735 = vpop.f32.mrf.mxu0
        %v736 = vadd.f32 0.0, %v735
        %v737 = vpop.f32.mrf.mxu0
        %v738 = vadd.f32 0.0, %v737
        %v739 = vpop.f32.mrf.mxu0
        %v740 = vadd.f32 0.0, %v739
        %v741 = vpop.f32.mrf.mxu0
        %v742 = vadd.f32 0.0, %v741
        %743 = vmatprep.mubr.bf16.mxu0 0
        %744 = vmatmul.mubr.bf16.gmra.mxu0 %v589
        %v745 = vpop.f32.mrf.mxu0
        %v746 = vadd.f32 0.0, %v745
        %v747 = vpop.f32.mrf.mxu0
        %v748 = vadd.f32 0.0, %v747
        %v749 = vpop.f32.mrf.mxu0
        %v750 = vadd.f32 0.0, %v749
        %v751 = vpop.f32.mrf.mxu0
        %v752 = vadd.f32 0.0, %v751
        %753 = vmatprep.mubr.bf16.mxu0 0
        %754 = vmatmul.mubr.bf16.gmra.mxu0 %v590
        %v755 = vpop.f32.mrf.mxu0
        %v756 = vadd.f32 0.0, %v755
        %v757 = vpop.f32.mrf.mxu0
        %v758 = vadd.f32 0.0, %v757
        %v759 = vpop.f32.mrf.mxu0
        %v760 = vadd.f32 0.0, %v759
        %v761 = vpop.f32.mrf.mxu0
        %v762 = vadd.f32 0.0, %v761
        %763 = vmatprep.mubr.bf16.mxu0 0
        %764 = vmatmul.mubr.bf16.gmra.mxu0 %v591
        %v765 = vpop.f32.mrf.mxu0
        %v766 = vadd.f32 0.0, %v765
        %v767 = vpop.f32.mrf.mxu0
        %v768 = vadd.f32 0.0, %v767
        %v769 = vpop.f32.mrf.mxu0
        %v770 = vadd.f32 0.0, %v769
        %v771 = vpop.f32.mrf.mxu0
        %v772 = vadd.f32 0.0, %v771
        %773 = vmatprep.mubr.bf16.mxu0 0
        %774 = vmatmul.mubr.bf16.gmra.mxu0 %v592
        %v775 = vpop.f32.mrf.mxu0
        %v776 = vadd.f32 0.0, %v775
        %v777 = vpop.f32.mrf.mxu0
        %v778 = vadd.f32 0.0, %v777
        %v779 = vpop.f32.mrf.mxu0
        %v780 = vadd.f32 0.0, %v779
        %v781 = vpop.f32.mrf.mxu0
        %v782 = vadd.f32 0.0, %v781
        %783 = vmatprep.mubr.bf16.mxu0 0
        %784 = vmatmul.mubr.bf16.gmra.mxu0 %v593
        %v785 = vpop.f32.mrf.mxu0
        %v786 = vadd.f32 0.0, %v785
        %v787 = vpop.f32.mrf.mxu0
        %v788 = vadd.f32 0.0, %v787
        %v789 = vpop.f32.mrf.mxu0
        %v790 = vadd.f32 0.0, %v789
        %v791 = vpop.f32.mrf.mxu0
        %v792 = vadd.f32 0.0, %v791
        %793 = vmatprep.mubr.bf16.mxu0 0
        %794 = vmatmul.mubr.bf16.gmra.mxu0 %v594
        %v795 = vpop.f32.mrf.mxu0
        %v796 = vadd.f32 0.0, %v795
        %v797 = vpop.f32.mrf.mxu0
        %v798 = vadd.f32 0.0, %v797
        %v799 = vpop.f32.mrf.mxu0
        %v800 = vadd.f32 0.0, %v799
        %v801 = vpop.f32.mrf.mxu0
        %v802 = vadd.f32 0.0, %v801
        %803 = vdwg.mxu0
        %v804 = vld [vmem:[%s413] sm:$0xff]
        %v805 = vld [vmem:[%s413 + $0x8] sm:$0xff]
        %v806 = vld [vmem:[%s413 + $0x10] sm:$0xff]
        %v807 = vld [vmem:[%s413 + $0x18] sm:$0xff]
        %v808 = vld [vmem:[%s413 + $0x20] sm:$0xff]
        %v809 = vld [vmem:[%s413 + $0x28] sm:$0xff]
        %v810 = vld [vmem:[%s413 + $0x30] sm:$0xff]
        %v811 = vld [vmem:[%s413 + $0x38] sm:$0xff]
        %v812 = vld [vmem:[%s413 + $0x40] sm:$0xff]
        %v813 = vld [vmem:[%s413 + $0x48] sm:$0xff]
        %v814 = vld [vmem:[%s413 + $0x50] sm:$0xff]
        %v815 = vld [vmem:[%s413 + $0x58] sm:$0xff]
        %v816 = vld [vmem:[%s413 + $0x60] sm:$0xff]
        %v817 = vld [vmem:[%s413 + $0x68] sm:$0xff]
        %v818 = vld [vmem:[%s413 + $0x70] sm:$0xff]
        %v819 = vld [vmem:[%s413 + $0x78] sm:$0xff]
        %v820 = vld [vmem:[%s413 + $0x80] sm:$0xff]
        %v821 = vld [vmem:[%s413 + $0x88] sm:$0xff]
        %v822 = vld [vmem:[%s413 + $0x90] sm:$0xff]
        %v823 = vld [vmem:[%s413 + $0x98] sm:$0xff]
        %v824 = vld [vmem:[%s413 + $0xa0] sm:$0xff]
        %v825 = vld [vmem:[%s413 + $0xa8] sm:$0xff]
        %v826 = vld [vmem:[%s413 + $0xb0] sm:$0xff]
        %v827 = vld [vmem:[%s413 + $0xb8] sm:$0xff]
        %v828 = vld [vmem:[%s413 + $0xc0] sm:$0xff]
        %v829 = vld [vmem:[%s413 + $0xc8] sm:$0xff]
        %v830 = vld [vmem:[%s413 + $0xd0] sm:$0xff]
        %v831 = vld [vmem:[%s413 + $0xd8] sm:$0xff]
        %v832 = vld [vmem:[%s413 + $0xe0] sm:$0xff]
        %v833 = vld [vmem:[%s413 + $0xe8] sm:$0xff]
        %v834 = vld [vmem:[%s413 + $0xf0] sm:$0xff]
        %v835 = vld [vmem:[%s413 + $0xf8] sm:$0xff]
        %v836 = vld [vmem:[%s413 + $0x100] sm:$0xff]
        %v837 = vld [vmem:[%s413 + $0x108] sm:$0xff]
        %v838 = vld [vmem:[%s413 + $0x110] sm:$0xff]
        %v839 = vld [vmem:[%s413 + $0x118] sm:$0xff]
        %v840 = vld [vmem:[%s413 + $0x120] sm:$0xff]
        %v841 = vld [vmem:[%s413 + $0x128] sm:$0xff]
        %v842 = vld [vmem:[%s413 + $0x130] sm:$0xff]
        %v843 = vld [vmem:[%s413 + $0x138] sm:$0xff]
        %v844 = vld [vmem:[%s413 + $0x140] sm:$0xff]
        %v845 = vld [vmem:[%s413 + $0x148] sm:$0xff]
        %v846 = vld [vmem:[%s413 + $0x150] sm:$0xff]
        %v847 = vld [vmem:[%s413 + $0x158] sm:$0xff]
        %v848 = vld [vmem:[%s413 + $0x160] sm:$0xff]
        %v849 = vld [vmem:[%s413 + $0x168] sm:$0xff]
        %v850 = vld [vmem:[%s413 + $0x170] sm:$0xff]
        %v851 = vld [vmem:[%s413 + $0x178] sm:$0xff]
        %v852 = vld [vmem:[%s413 + $0x180] sm:$0xff]
        %v853 = vld [vmem:[%s413 + $0x188] sm:$0xff]
        %v854 = vld [vmem:[%s413 + $0x190] sm:$0xff]
        %v855 = vld [vmem:[%s413 + $0x198] sm:$0xff]
        %v856 = vld [vmem:[%s413 + $0x1a0] sm:$0xff]
        %v857 = vld [vmem:[%s413 + $0x1a8] sm:$0xff]
        %v858 = vld [vmem:[%s413 + $0x1b0] sm:$0xff]
        %v859 = vld [vmem:[%s413 + $0x1b8] sm:$0xff]
        %v860 = vld [vmem:[%s413 + $0x1c0] sm:$0xff]
        %v861 = vld [vmem:[%s413 + $0x1c8] sm:$0xff]
        %v862 = vld [vmem:[%s413 + $0x1d0] sm:$0xff]
        %v863 = vld [vmem:[%s413 + $0x1d8] sm:$0xff]
        %v864 = vld [vmem:[%s413 + $0x1e0] sm:$0xff]
        %v865 = vld [vmem:[%s413 + $0x1e8] sm:$0xff]
        %v866 = vld [vmem:[%s413 + $0x1f0] sm:$0xff]
        %v867 = vld [vmem:[%s413 + $0x1f8] sm:$0xff]
        %v868 = vmul.f32 %v646, 5.1020408e-05
        %v869 = vmul.f32 %v648, 5.1020408e-05
        %v870 = vmul.f32 %v650, 5.1020408e-05
        %v871 = vmul.f32 %v652, 5.1020408e-05
        %v872 = vmul.f32 %v656, 5.1020408e-05
        %v873 = vmul.f32 %v658, 5.1020408e-05
        %v874 = vmul.f32 %v660, 5.1020408e-05
        %v875 = vmul.f32 %v662, 5.1020408e-05
        %v876 = vmul.f32 %v666, 5.1020408e-05
        %v877 = vmul.f32 %v668, 5.1020408e-05
        %v878 = vmul.f32 %v670, 5.1020408e-05
        %v879 = vmul.f32 %v672, 5.1020408e-05
        %v880 = vmul.f32 %v676, 5.1020408e-05
        %v881 = vmul.f32 %v678, 5.1020408e-05
        %v882 = vmul.f32 %v680, 5.1020408e-05
        %v883 = vmul.f32 %v682, 5.1020408e-05
        %v884 = vmul.f32 %v686, 5.1020408e-05
        %v885 = vmul.f32 %v688, 5.1020408e-05
        %v886 = vmul.f32 %v690, 5.1020408e-05
        %v887 = vmul.f32 %v692, 5.1020408e-05
        %v888 = vmul.f32 %v696, 5.1020408e-05
        %v889 = vmul.f32 %v698, 5.1020408e-05
        %v890 = vmul.f32 %v700, 5.1020408e-05
        %v891 = vmul.f32 %v702, 5.1020408e-05
        %v892 = vmul.f32 %v706, 5.1020408e-05
        %v893 = vmul.f32 %v708, 5.1020408e-05
        %v894 = vmul.f32 %v710, 5.1020408e-05
        %v895 = vmul.f32 %v712, 5.1020408e-05
        %v896 = vmul.f32 %v716, 5.1020408e-05
        %v897 = vmul.f32 %v718, 5.1020408e-05
        %v898 = vmul.f32 %v720, 5.1020408e-05
        %v899 = vmul.f32 %v722, 5.1020408e-05
        %v900 = vmul.f32 %v726, 5.1020408e-05
        %v901 = vmul.f32 %v728, 5.1020408e-05
        %v902 = vmul.f32 %v730, 5.1020408e-05
        %v903 = vmul.f32 %v732, 5.1020408e-05
        %v904 = vmul.f32 %v736, 5.1020408e-05
        %v905 = vmul.f32 %v738, 5.1020408e-05
        %v906 = vmul.f32 %v740, 5.1020408e-05
        %v907 = vmul.f32 %v742, 5.1020408e-05
        %v908 = vmul.f32 %v746, 5.1020408e-05
        %v909 = vmul.f32 %v748, 5.1020408e-05
        %v910 = vmul.f32 %v750, 5.1020408e-05
        %v911 = vmul.f32 %v752, 5.1020408e-05
        %v912 = vmul.f32 %v756, 5.1020408e-05
        %v913 = vmul.f32 %v758, 5.1020408e-05
        %v914 = vmul.f32 %v760, 5.1020408e-05
        %v915 = vmul.f32 %v762, 5.1020408e-05
        %v916 = vmul.f32 %v766, 5.1020408e-05
        %v917 = vmul.f32 %v768, 5.1020408e-05
        %v918 = vmul.f32 %v770, 5.1020408e-05
        %v919 = vmul.f32 %v772, 5.1020408e-05
        %v920 = vmul.f32 %v776, 5.1020408e-05
        %v921 = vmul.f32 %v778, 5.1020408e-05
        %v922 = vmul.f32 %v780, 5.1020408e-05
        %v923 = vmul.f32 %v782, 5.1020408e-05
        %v924 = vmul.f32 %v786, 5.1020408e-05
        %v925 = vmul.f32 %v788, 5.1020408e-05
        %v926 = vmul.f32 %v790, 5.1020408e-05
        %v927 = vmul.f32 %v792, 5.1020408e-05
        %v928 = vmul.f32 %v796, 5.1020408e-05
        %v929 = vmul.f32 %v798, 5.1020408e-05
        %v930 = vmul.f32 %v800, 5.1020408e-05
        %v931 = vmul.f32 %v802, 5.1020408e-05
        %v932 = vadd.f32 %v804, %v868
        %v933 = vadd.f32 %v805, %v869
        %v934 = vadd.f32 %v806, %v870
        %v935 = vadd.f32 %v807, %v871
        %v936 = vadd.f32 %v808, %v872
        %v937 = vadd.f32 %v809, %v873
        %v938 = vadd.f32 %v810, %v874
        %v939 = vadd.f32 %v811, %v875
        %v940 = vadd.f32 %v812, %v876
        %v941 = vadd.f32 %v813, %v877
        %v942 = vadd.f32 %v814, %v878
        %v943 = vadd.f32 %v815, %v879
        %v944 = vadd.f32 %v816, %v880
        %v945 = vadd.f32 %v817, %v881
        %v946 = vadd.f32 %v818, %v882
        %v947 = vadd.f32 %v819, %v883
        %v948 = vadd.f32 %v820, %v884
        %v949 = vadd.f32 %v821, %v885
        %v950 = vadd.f32 %v822, %v886
        %v951 = vadd.f32 %v823, %v887
        %v952 = vadd.f32 %v824, %v888
        %v953 = vadd.f32 %v825, %v889
        %v954 = vadd.f32 %v826, %v890
        %v955 = vadd.f32 %v827, %v891
        %v956 = vadd.f32 %v828, %v892
        %v957 = vadd.f32 %v829, %v893
        %v958 = vadd.f32 %v830, %v894
        %v959 = vadd.f32 %v831, %v895
        %v960 = vadd.f32 %v832, %v896
        %v961 = vadd.f32 %v833, %v897
        %v962 = vadd.f32 %v834, %v898
        %v963 = vadd.f32 %v835, %v899
        %v964 = vadd.f32 %v836, %v900
        %v965 = vadd.f32 %v837, %v901
        %v966 = vadd.f32 %v838, %v902
        %v967 = vadd.f32 %v839, %v903
        %v968 = vadd.f32 %v840, %v904
        %v969 = vadd.f32 %v841, %v905
        %v970 = vadd.f32 %v842, %v906
        %v971 = vadd.f32 %v843, %v907
        %v972 = vadd.f32 %v844, %v908
        %v973 = vadd.f32 %v845, %v909
        %v974 = vadd.f32 %v846, %v910
        %v975 = vadd.f32 %v847, %v911
        %v976 = vadd.f32 %v848, %v912
        %v977 = vadd.f32 %v849, %v913
        %v978 = vadd.f32 %v850, %v914
        %v979 = vadd.f32 %v851, %v915
        %v980 = vadd.f32 %v852, %v916
        %v981 = vadd.f32 %v853, %v917
        %v982 = vadd.f32 %v854, %v918
        %v983 = vadd.f32 %v855, %v919
        %v984 = vadd.f32 %v856, %v920
        %v985 = vadd.f32 %v857, %v921
        %v986 = vadd.f32 %v858, %v922
        %v987 = vadd.f32 %v859, %v923
        %v988 = vadd.f32 %v860, %v924
        %v989 = vadd.f32 %v861, %v925
        %v990 = vadd.f32 %v862, %v926
        %v991 = vadd.f32 %v863, %v927
        %v992 = vadd.f32 %v864, %v928
        %v993 = vadd.f32 %v865, %v929
        %v994 = vadd.f32 %v866, %v930
        %v995 = vadd.f32 %v867, %v931
        %996 = vst [vmem:[%s413] sm:$0xff] %v932
        %997 = vst [vmem:[%s413 + $0x8] sm:$0xff] %v933
        %998 = vst [vmem:[%s413 + $0x10] sm:$0xff] %v934
        %999 = vst [vmem:[%s413 + $0x18] sm:$0xff] %v935
        %1000 = vst [vmem:[%s413 + $0x20] sm:$0xff] %v936
        %1001 = vst [vmem:[%s413 + $0x28] sm:$0xff] %v937
        %1002 = vst [vmem:[%s413 + $0x30] sm:$0xff] %v938
        %1003 = vst [vmem:[%s413 + $0x38] sm:$0xff] %v939
        %1004 = vst [vmem:[%s413 + $0x40] sm:$0xff] %v940
        %1005 = vst [vmem:[%s413 + $0x48] sm:$0xff] %v941
        %1006 = vst [vmem:[%s413 + $0x50] sm:$0xff] %v942
        %1007 = vst [vmem:[%s413 + $0x58] sm:$0xff] %v943
        %1008 = vst [vmem:[%s413 + $0x60] sm:$0xff] %v944
        %1009 = vst [vmem:[%s413 + $0x68] sm:$0xff] %v945
        %1010 = vst [vmem:[%s413 + $0x70] sm:$0xff] %v946
        %1011 = vst [vmem:[%s413 + $0x78] sm:$0xff] %v947
        %1012 = vst [vmem:[%s413 + $0x80] sm:$0xff] %v948
        %1013 = vst [vmem:[%s413 + $0x88] sm:$0xff] %v949
        %1014 = vst [vmem:[%s413 + $0x90] sm:$0xff] %v950
        %1015 = vst [vmem:[%s413 + $0x98] sm:$0xff] %v951
        %1016 = vst [vmem:[%s413 + $0xa0] sm:$0xff] %v952
        %1017 = vst [vmem:[%s413 + $0xa8] sm:$0xff] %v953
        %1018 = vst [vmem:[%s413 + $0xb0] sm:$0xff] %v954
        %1019 = vst [vmem:[%s413 + $0xb8] sm:$0xff] %v955
        %1020 = vst [vmem:[%s413 + $0xc0] sm:$0xff] %v956
        %1021 = vst [vmem:[%s413 + $0xc8] sm:$0xff] %v957
        %1022 = vst [vmem:[%s413 + $0xd0] sm:$0xff] %v958
        %1023 = vst [vmem:[%s413 + $0xd8] sm:$0xff] %v959
        %1024 = vst [vmem:[%s413 + $0xe0] sm:$0xff] %v960
        %1025 = vst [vmem:[%s413 + $0xe8] sm:$0xff] %v961
        %1026 = vst [vmem:[%s413 + $0xf0] sm:$0xff] %v962
        %1027 = vst [vmem:[%s413 + $0xf8] sm:$0xff] %v963
        %1028 = vst [vmem:[%s413 + $0x100] sm:$0xff] %v964
        %1029 = vst [vmem:[%s413 + $0x108] sm:$0xff] %v965
        %1030 = vst [vmem:[%s413 + $0x110] sm:$0xff] %v966
        %1031 = vst [vmem:[%s413 + $0x118] sm:$0xff] %v967
        %1032 = vst [vmem:[%s413 + $0x120] sm:$0xff] %v968
        %1033 = vst [vmem:[%s413 + $0x128] sm:$0xff] %v969
        %1034 = vst [vmem:[%s413 + $0x130] sm:$0xff] %v970
        %1035 = vst [vmem:[%s413 + $0x138] sm:$0xff] %v971
        %1036 = vst [vmem:[%s413 + $0x140] sm:$0xff] %v972
        %1037 = vst [vmem:[%s413 + $0x148] sm:$0xff] %v973
        %1038 = vst [vmem:[%s413 + $0x150] sm:$0xff] %v974
        %1039 = vst [vmem:[%s413 + $0x158] sm:$0xff] %v975
        %1040 = vst [vmem:[%s413 + $0x160] sm:$0xff] %v976
        %1041 = vst [vmem:[%s413 + $0x168] sm:$0xff] %v977
        %1042 = vst [vmem:[%s413 + $0x170] sm:$0xff] %v978
        %1043 = vst [vmem:[%s413 + $0x178] sm:$0xff] %v979
        %1044 = vst [vmem:[%s413 + $0x180] sm:$0xff] %v980
        %1045 = vst [vmem:[%s413 + $0x188] sm:$0xff] %v981
        %1046 = vst [vmem:[%s413 + $0x190] sm:$0xff] %v982
        %1047 = vst [vmem:[%s413 + $0x198] sm:$0xff] %v983
        %1048 = vst [vmem:[%s413 + $0x1a0] sm:$0xff] %v984
        %1049 = vst [vmem:[%s413 + $0x1a8] sm:$0xff] %v985
        %1050 = vst [vmem:[%s413 + $0x1b0] sm:$0xff] %v986
        %1051 = vst [vmem:[%s413 + $0x1b8] sm:$0xff] %v987
        %1052 = vst [vmem:[%s413 + $0x1c0] sm:$0xff] %v988
        %1053 = vst [vmem:[%s413 + $0x1c8] sm:$0xff] %v989
        %1054 = vst [vmem:[%s413 + $0x1d0] sm:$0xff] %v990
        %1055 = vst [vmem:[%s413 + $0x1d8] sm:$0xff] %v991
        %1056 = vst [vmem:[%s413 + $0x1e0] sm:$0xff] %v992
        %1057 = vst [vmem:[%s413 + $0x1e8] sm:$0xff] %v993
        %1058 = vst [vmem:[%s413 + $0x1f0] sm:$0xff] %v994
        %1059 = vst [vmem:[%s413 + $0x1f8] sm:$0xff] %v995
        %p1060 = scmp.lt.s32.totalorder %s20, 1
        %s1061 = sadd.s32 %s19, %s20
        %p1062 = scmp.lt.s32.totalorder %s1061, 1
        %p1063 = pnand %p1060, %p1062
        %p1064 = pneg %p1063
        // Predicated region
        $region74: #{extract_patches_rec_style_gram.1} parent=64 // pred_check
          _
        $region75: #{extract_patches_rec_style_gram.1} parent=64 // pred_check_branch
          %1066 = sbr.rel (%p1063) target = $region77
        $region76: #{extract_patches_rec_style_gram.1} parent=64 // pred_region
          %v1067 = vld [vmem:[%s399] sm:$0xf]
          %v1068 = vld [vmem:[%s399 + $0x4] sm:$0xf]
          %v1069 = vld [vmem:[%s399 + $0x8] sm:$0xf]
          %v1070 = vld [vmem:[%s399 + $0xc] sm:$0xf]
          %v1071 = vld [vmem:[%s399 + $0x10] sm:$0xf]
          %v1072 = vld [vmem:[%s399 + $0x14] sm:$0xf]
          %v1073 = vld [vmem:[%s399 + $0x18] sm:$0xf]
          %v1074 = vld [vmem:[%s399 + $0x1c] sm:$0xf]
          %v1075 = vld [vmem:[%s399 + $0x20] sm:$0xf]
          %v1076 = vld [vmem:[%s399 + $0x24] sm:$0xf]
          %v1077 = vld [vmem:[%s399 + $0x28] sm:$0xf]
          %v1078 = vld [vmem:[%s399 + $0x2c] sm:$0xf]
          %v1079 = vld [vmem:[%s399 + $0x30] sm:$0xf]
          %v1080 = vld [vmem:[%s399 + $0x34] sm:$0xf]
          %v1081 = vld [vmem:[%s399 + $0x38] sm:$0xf]
          %v1082 = vld [vmem:[%s399 + $0x3c] sm:$0xf]
          %v1083 = vld [vmem:[%s399 + $0x40] sm:$0xf]
          %v1084 = vld [vmem:[%s399 + $0x44] sm:$0xf]
          %v1085 = vld [vmem:[%s399 + $0x48] sm:$0xf]
          %v1086 = vld [vmem:[%s399 + $0x4c] sm:$0xf]
          %v1087 = vld [vmem:[%s399 + $0x50] sm:$0xf]
          %v1088 = vld [vmem:[%s399 + $0x54] sm:$0xf]
          %v1089 = vld [vmem:[%s399 + $0x58] sm:$0xf]
          %v1090 = vld [vmem:[%s399 + $0x5c] sm:$0xf]
          %v1091 = vld [vmem:[%s399 + $0x60] sm:$0xf]
          %v1092 = vld [vmem:[%s399 + $0x64] sm:$0xf]
          %v1093 = vld [vmem:[%s399 + $0x68] sm:$0xf]
          %v1094 = vld [vmem:[%s399 + $0x6c] sm:$0xf]
          %v1095 = vld [vmem:[%s399 + $0x70] sm:$0xf]
          %v1096 = vld [vmem:[%s399 + $0x74] sm:$0xf]
          %v1097 = vld [vmem:[%s399 + $0x78] sm:$0xf]
          %v1098 = vld [vmem:[%s399 + $0x7c] sm:$0xf]
          %v1131 = vunpack.c.l.b16 %v1067
          %v1132 = vunpack.c.l.b16 %v1068
          %v1133 = vunpack.c.l.b16 %v1069
          %v1134 = vunpack.c.l.b16 %v1070
          %v1135 = vunpack.c.l.b16 %v1071
          %v1136 = vunpack.c.l.b16 %v1072
          %v1137 = vunpack.c.l.b16 %v1073
          %v1138 = vunpack.c.l.b16 %v1074
          %v1139 = vunpack.c.l.b16 %v1075
          %v1140 = vunpack.c.l.b16 %v1076
          %v1141 = vunpack.c.l.b16 %v1077
          %v1142 = vunpack.c.l.b16 %v1078
          %v1143 = vunpack.c.l.b16 %v1079
          %v1144 = vunpack.c.l.b16 %v1080
          %v1145 = vunpack.c.l.b16 %v1081
          %v1146 = vunpack.c.l.b16 %v1082
          %v1147 = vunpack.c.l.b16 %v1083
          %v1148 = vunpack.c.l.b16 %v1084
          %v1149 = vunpack.c.l.b16 %v1085
          %v1150 = vunpack.c.l.b16 %v1086
          %v1151 = vunpack.c.l.b16 %v1087
          %v1152 = vunpack.c.l.b16 %v1088
          %v1153 = vunpack.c.l.b16 %v1089
          %v1154 = vunpack.c.l.b16 %v1090
          %v1155 = vunpack.c.l.b16 %v1091
          %v1156 = vunpack.c.l.b16 %v1092
          %v1157 = vunpack.c.l.b16 %v1093
          %v1158 = vunpack.c.l.b16 %v1094
          %v1159 = vunpack.c.l.b16 %v1095
          %v1160 = vunpack.c.l.b16 %v1096
          %v1161 = vunpack.c.l.b16 %v1097
          %v1162 = vunpack.c.l.b16 %v1098
          %v1163 = vpack.c.b16 %v1132, %v1131
          %v1164 = vpack.c.b16 %v1134, %v1133
          %v1165 = vpack.c.b16 %v1136, %v1135
          %v1166 = vpack.c.b16 %v1138, %v1137
          %v1167 = vpack.c.b16 %v1140, %v1139
          %v1168 = vpack.c.b16 %v1142, %v1141
          %v1169 = vpack.c.b16 %v1144, %v1143
          %v1170 = vpack.c.b16 %v1146, %v1145
          %v1171 = vpack.c.b16 %v1148, %v1147
          %v1172 = vpack.c.b16 %v1150, %v1149
          %v1173 = vpack.c.b16 %v1152, %v1151
          %v1174 = vpack.c.b16 %v1154, %v1153
          %v1175 = vpack.c.b16 %v1156, %v1155
          %v1176 = vpack.c.b16 %v1158, %v1157
          %v1177 = vpack.c.b16 %v1160, %v1159
          %v1178 = vpack.c.b16 %v1162, %v1161
          %1195 = vmatprep.subr.bf16.mxu0 0
          %1196 = vmatpush1.bf16.xpose.msra.mxu0 %v1170
          %1197 = vmatprep.subr.bf16.mxu0 0
          %1198 = vmatpush1.bf16.xpose.msra.mxu0 %v1169
          %1199 = vmatprep.subr.bf16.mxu0 0
          %1200 = vmatpush1.bf16.xpose.msra.mxu0 %v1168
          %1201 = vmatprep.subr.bf16.mxu0 0
          %1202 = vmatpush1.bf16.xpose.msra.mxu0 %v1167
          %1203 = vmatprep.subr.bf16.mxu0 0
          %1204 = vmatpush1.bf16.xpose.msra.mxu0 %v1166
          %1205 = vmatprep.subr.bf16.mxu0 0
          %1206 = vmatpush1.bf16.xpose.msra.mxu0 %v1165
          %1207 = vmatprep.subr.bf16.mxu0 0
          %1208 = vmatpush1.bf16.xpose.msra.mxu0 %v1164
          %1209 = vmatprep.subr.bf16.mxu0 0
          %1210 = vmatpush1.bf16.xpose.msra.mxu0 %v1163
          %1211 = vmatprep.subr.bf16.mxu0 0
          %1212 = vmatpush2.bf16.xpose.msra.mxu0 %v1178
          %1213 = vmatprep.subr.bf16.mxu0 0
          %1214 = vmatpush2.bf16.xpose.msra.mxu0 %v1177
          %1215 = vmatprep.subr.bf16.mxu0 0
          %1216 = vmatpush2.bf16.xpose.msra.mxu0 %v1176
          %1217 = vmatprep.subr.bf16.mxu0 0
          %1218 = vmatpush2.bf16.xpose.msra.mxu0 %v1175
          %1219 = vmatprep.subr.bf16.mxu0 0
          %1220 = vmatpush2.bf16.xpose.msra.mxu0 %v1174
          %1221 = vmatprep.subr.bf16.mxu0 0
          %1222 = vmatpush2.bf16.xpose.msra.mxu0 %v1173
          %1223 = vmatprep.subr.bf16.mxu0 0
          %1224 = vmatpush2.bf16.xpose.msra.mxu0 %v1172
          %1225 = vmatprep.subr.bf16.mxu0 0
          %1226 = vmatpush2.bf16.xpose.msra.mxu0 %v1171
          %1227 = vmatprep.mubr.bf16.mxu0 0
          %1228 = vmatmul.mubr.bf16.gmra.mxu0 %v1163
          %v1229 = vpop.f32.mrf.mxu0
          %v1230 = vadd.f32 0.0, %v1229
          %v1231 = vpop.f32.mrf.mxu0
          %v1232 = vadd.f32 0.0, %v1231
          %v1233 = vpop.f32.mrf.mxu0
          %v1234 = vadd.f32 0.0, %v1233
          %v1235 = vpop.f32.mrf.mxu0
          %v1236 = vadd.f32 0.0, %v1235
          %1237 = vmatprep.mubr.bf16.mxu0 0
          %1238 = vmatmul.mubr.bf16.gmra.mxu0 %v1164
          %v1239 = vpop.f32.mrf.mxu0
          %v1240 = vadd.f32 0.0, %v1239
          %v1241 = vpop.f32.mrf.mxu0
          %v1242 = vadd.f32 0.0, %v1241
          %v1243 = vpop.f32.mrf.mxu0
          %v1244 = vadd.f32 0.0, %v1243
          %v1245 = vpop.f32.mrf.mxu0
          %v1246 = vadd.f32 0.0, %v1245
          %1247 = vmatprep.mubr.bf16.mxu0 0
          %1248 = vmatmul.mubr.bf16.gmra.mxu0 %v1165
          %v1249 = vpop.f32.mrf.mxu0
          %v1250 = vadd.f32 0.0, %v1249
          %v1251 = vpop.f32.mrf.mxu0
          %v1252 = vadd.f32 0.0, %v1251
          %v1253 = vpop.f32.mrf.mxu0
          %v1254 = vadd.f32 0.0, %v1253
          %v1255 = vpop.f32.mrf.mxu0
          %v1256 = vadd.f32 0.0, %v1255
          %1257 = vmatprep.mubr.bf16.mxu0 0
          %1258 = vmatmul.mubr.bf16.gmra.mxu0 %v1166
          %v1259 = vpop.f32.mrf.mxu0
          %v1260 = vadd.f32 0.0, %v1259
          %v1261 = vpop.f32.mrf.mxu0
          %v1262 = vadd.f32 0.0, %v1261
          %v1263 = vpop.f32.mrf.mxu0
          %v1264 = vadd.f32 0.0, %v1263
          %v1265 = vpop.f32.mrf.mxu0
          %v1266 = vadd.f32 0.0, %v1265
          %1267 = vmatprep.mubr.bf16.mxu0 0
          %1268 = vmatmul.mubr.bf16.gmra.mxu0 %v1167
          %v1269 = vpop.f32.mrf.mxu0
          %v1270 = vadd.f32 0.0, %v1269
          %v1271 = vpop.f32.mrf.mxu0
          %v1272 = vadd.f32 0.0, %v1271
          %v1273 = vpop.f32.mrf.mxu0
          %v1274 = vadd.f32 0.0, %v1273
          %v1275 = vpop.f32.mrf.mxu0
          %v1276 = vadd.f32 0.0, %v1275
          %1277 = vmatprep.mubr.bf16.mxu0 0
          %1278 = vmatmul.mubr.bf16.gmra.mxu0 %v1168
          %v1279 = vpop.f32.mrf.mxu0
          %v1280 = vadd.f32 0.0, %v1279
          %v1281 = vpop.f32.mrf.mxu0
          %v1282 = vadd.f32 0.0, %v1281
          %v1283 = vpop.f32.mrf.mxu0
          %v1284 = vadd.f32 0.0, %v1283
          %v1285 = vpop.f32.mrf.mxu0
          %v1286 = vadd.f32 0.0, %v1285
          %1287 = vmatprep.mubr.bf16.mxu0 0
          %1288 = vmatmul.mubr.bf16.gmra.mxu0 %v1169
          %v1289 = vpop.f32.mrf.mxu0
          %v1290 = vadd.f32 0.0, %v1289
          %v1291 = vpop.f32.mrf.mxu0
          %v1292 = vadd.f32 0.0, %v1291
          %v1293 = vpop.f32.mrf.mxu0
          %v1294 = vadd.f32 0.0, %v1293
          %v1295 = vpop.f32.mrf.mxu0
          %v1296 = vadd.f32 0.0, %v1295
          %1297 = vmatprep.mubr.bf16.mxu0 0
          %1298 = vmatmul.mubr.bf16.gmra.mxu0 %v1170
          %v1299 = vpop.f32.mrf.mxu0
          %v1300 = vadd.f32 0.0, %v1299
          %v1301 = vpop.f32.mrf.mxu0
          %v1302 = vadd.f32 0.0, %v1301
          %v1303 = vpop.f32.mrf.mxu0
          %v1304 = vadd.f32 0.0, %v1303
          %v1305 = vpop.f32.mrf.mxu0
          %v1306 = vadd.f32 0.0, %v1305
          %1307 = vmatprep.mubr.bf16.mxu0 0
          %1308 = vmatmul.mubr.bf16.gmra.mxu0 %v1171
          %v1309 = vpop.f32.mrf.mxu0
          %v1310 = vadd.f32 0.0, %v1309
          %v1311 = vpop.f32.mrf.mxu0
          %v1312 = vadd.f32 0.0, %v1311
          %v1313 = vpop.f32.mrf.mxu0
          %v1314 = vadd.f32 0.0, %v1313
          %v1315 = vpop.f32.mrf.mxu0
          %v1316 = vadd.f32 0.0, %v1315
          %1317 = vmatprep.mubr.bf16.mxu0 0
          %1318 = vmatmul.mubr.bf16.gmra.mxu0 %v1172
          %v1319 = vpop.f32.mrf.mxu0
          %v1320 = vadd.f32 0.0, %v1319
          %v1321 = vpop.f32.mrf.mxu0
          %v1322 = vadd.f32 0.0, %v1321
          %v1323 = vpop.f32.mrf.mxu0
          %v1324 = vadd.f32 0.0, %v1323
          %v1325 = vpop.f32.mrf.mxu0
          %v1326 = vadd.f32 0.0, %v1325
          %1327 = vmatprep.mubr.bf16.mxu0 0
          %1328 = vmatmul.mubr.bf16.gmra.mxu0 %v1173
          %v1329 = vpop.f32.mrf.mxu0
          %v1330 = vadd.f32 0.0, %v1329
          %v1331 = vpop.f32.mrf.mxu0
          %v1332 = vadd.f32 0.0, %v1331
          %v1333 = vpop.f32.mrf.mxu0
          %v1334 = vadd.f32 0.0, %v1333
          %v1335 = vpop.f32.mrf.mxu0
          %v1336 = vadd.f32 0.0, %v1335
          %1337 = vmatprep.mubr.bf16.mxu0 0
          %1338 = vmatmul.mubr.bf16.gmra.mxu0 %v1174
          %v1339 = vpop.f32.mrf.mxu0
          %v1340 = vadd.f32 0.0, %v1339
          %v1341 = vpop.f32.mrf.mxu0
          %v1342 = vadd.f32 0.0, %v1341
          %v1343 = vpop.f32.mrf.mxu0
          %v1344 = vadd.f32 0.0, %v1343
          %v1345 = vpop.f32.mrf.mxu0
          %v1346 = vadd.f32 0.0, %v1345
          %1347 = vmatprep.mubr.bf16.mxu0 0
          %1348 = vmatmul.mubr.bf16.gmra.mxu0 %v1175
          %v1349 = vpop.f32.mrf.mxu0
          %v1350 = vadd.f32 0.0, %v1349
          %v1351 = vpop.f32.mrf.mxu0
          %v1352 = vadd.f32 0.0, %v1351
          %v1353 = vpop.f32.mrf.mxu0
          %v1354 = vadd.f32 0.0, %v1353
          %v1355 = vpop.f32.mrf.mxu0
          %v1356 = vadd.f32 0.0, %v1355
          %1357 = vmatprep.mubr.bf16.mxu0 0
          %1358 = vmatmul.mubr.bf16.gmra.mxu0 %v1176
          %v1359 = vpop.f32.mrf.mxu0
          %v1360 = vadd.f32 0.0, %v1359
          %v1361 = vpop.f32.mrf.mxu0
          %v1362 = vadd.f32 0.0, %v1361
          %v1363 = vpop.f32.mrf.mxu0
          %v1364 = vadd.f32 0.0, %v1363
          %v1365 = vpop.f32.mrf.mxu0
          %v1366 = vadd.f32 0.0, %v1365
          %1367 = vmatprep.mubr.bf16.mxu0 0
          %1368 = vmatmul.mubr.bf16.gmra.mxu0 %v1177
          %v1369 = vpop.f32.mrf.mxu0
          %v1370 = vadd.f32 0.0, %v1369
          %v1371 = vpop.f32.mrf.mxu0
          %v1372 = vadd.f32 0.0, %v1371
          %v1373 = vpop.f32.mrf.mxu0
          %v1374 = vadd.f32 0.0, %v1373
          %v1375 = vpop.f32.mrf.mxu0
          %v1376 = vadd.f32 0.0, %v1375
          %1377 = vmatprep.mubr.bf16.mxu0 0
          %1378 = vmatmul.mubr.bf16.gmra.mxu0 %v1178
          %v1379 = vpop.f32.mrf.mxu0
          %v1380 = vadd.f32 0.0, %v1379
          %v1381 = vpop.f32.mrf.mxu0
          %v1382 = vadd.f32 0.0, %v1381
          %v1383 = vpop.f32.mrf.mxu0
          %v1384 = vadd.f32 0.0, %v1383
          %v1385 = vpop.f32.mrf.mxu0
          %v1386 = vadd.f32 0.0, %v1385
          %1387 = vdwg.mxu0
          %v1388 = vld [vmem:[%s413] sm:$0xff]
          %v1389 = vld [vmem:[%s413 + $0x8] sm:$0xff]
          %v1390 = vld [vmem:[%s413 + $0x10] sm:$0xff]
          %v1391 = vld [vmem:[%s413 + $0x18] sm:$0xff]
          %v1392 = vld [vmem:[%s413 + $0x20] sm:$0xff]
          %v1393 = vld [vmem:[%s413 + $0x28] sm:$0xff]
          %v1394 = vld [vmem:[%s413 + $0x30] sm:$0xff]
          %v1395 = vld [vmem:[%s413 + $0x38] sm:$0xff]
          %v1396 = vld [vmem:[%s413 + $0x40] sm:$0xff]
          %v1397 = vld [vmem:[%s413 + $0x48] sm:$0xff]
          %v1398 = vld [vmem:[%s413 + $0x50] sm:$0xff]
          %v1399 = vld [vmem:[%s413 + $0x58] sm:$0xff]
          %v1400 = vld [vmem:[%s413 + $0x60] sm:$0xff]
          %v1401 = vld [vmem:[%s413 + $0x68] sm:$0xff]
          %v1402 = vld [vmem:[%s413 + $0x70] sm:$0xff]
          %v1403 = vld [vmem:[%s413 + $0x78] sm:$0xff]
          %v1404 = vld [vmem:[%s413 + $0x80] sm:$0xff]
          %v1405 = vld [vmem:[%s413 + $0x88] sm:$0xff]
          %v1406 = vld [vmem:[%s413 + $0x90] sm:$0xff]
          %v1407 = vld [vmem:[%s413 + $0x98] sm:$0xff]
          %v1408 = vld [vmem:[%s413 + $0xa0] sm:$0xff]
          %v1409 = vld [vmem:[%s413 + $0xa8] sm:$0xff]
          %v1410 = vld [vmem:[%s413 + $0xb0] sm:$0xff]
          %v1411 = vld [vmem:[%s413 + $0xb8] sm:$0xff]
          %v1412 = vld [vmem:[%s413 + $0xc0] sm:$0xff]
          %v1413 = vld [vmem:[%s413 + $0xc8] sm:$0xff]
          %v1414 = vld [vmem:[%s413 + $0xd0] sm:$0xff]
          %v1415 = vld [vmem:[%s413 + $0xd8] sm:$0xff]
          %v1416 = vld [vmem:[%s413 + $0xe0] sm:$0xff]
          %v1417 = vld [vmem:[%s413 + $0xe8] sm:$0xff]
          %v1418 = vld [vmem:[%s413 + $0xf0] sm:$0xff]
          %v1419 = vld [vmem:[%s413 + $0xf8] sm:$0xff]
          %v1420 = vld [vmem:[%s413 + $0x100] sm:$0xff]
          %v1421 = vld [vmem:[%s413 + $0x108] sm:$0xff]
          %v1422 = vld [vmem:[%s413 + $0x110] sm:$0xff]
          %v1423 = vld [vmem:[%s413 + $0x118] sm:$0xff]
          %v1424 = vld [vmem:[%s413 + $0x120] sm:$0xff]
          %v1425 = vld [vmem:[%s413 + $0x128] sm:$0xff]
          %v1426 = vld [vmem:[%s413 + $0x130] sm:$0xff]
          %v1427 = vld [vmem:[%s413 + $0x138] sm:$0xff]
          %v1428 = vld [vmem:[%s413 + $0x140] sm:$0xff]
          %v1429 = vld [vmem:[%s413 + $0x148] sm:$0xff]
          %v1430 = vld [vmem:[%s413 + $0x150] sm:$0xff]
          %v1431 = vld [vmem:[%s413 + $0x158] sm:$0xff]
          %v1432 = vld [vmem:[%s413 + $0x160] sm:$0xff]
          %v1433 = vld [vmem:[%s413 + $0x168] sm:$0xff]
          %v1434 = vld [vmem:[%s413 + $0x170] sm:$0xff]
          %v1435 = vld [vmem:[%s413 + $0x178] sm:$0xff]
          %v1436 = vld [vmem:[%s413 + $0x180] sm:$0xff]
          %v1437 = vld [vmem:[%s413 + $0x188] sm:$0xff]
          %v1438 = vld [vmem:[%s413 + $0x190] sm:$0xff]
          %v1439 = vld [vmem:[%s413 + $0x198] sm:$0xff]
          %v1440 = vld [vmem:[%s413 + $0x1a0] sm:$0xff]
          %v1441 = vld [vmem:[%s413 + $0x1a8] sm:$0xff]
          %v1442 = vld [vmem:[%s413 + $0x1b0] sm:$0xff]
          %v1443 = vld [vmem:[%s413 + $0x1b8] sm:$0xff]
          %v1444 = vld [vmem:[%s413 + $0x1c0] sm:$0xff]
          %v1445 = vld [vmem:[%s413 + $0x1c8] sm:$0xff]
          %v1446 = vld [vmem:[%s413 + $0x1d0] sm:$0xff]
          %v1447 = vld [vmem:[%s413 + $0x1d8] sm:$0xff]
          %v1448 = vld [vmem:[%s413 + $0x1e0] sm:$0xff]
          %v1449 = vld [vmem:[%s413 + $0x1e8] sm:$0xff]
          %v1450 = vld [vmem:[%s413 + $0x1f0] sm:$0xff]
          %v1451 = vld [vmem:[%s413 + $0x1f8] sm:$0xff]
          %v1452 = vmul.f32 %v1230, -0.0012755102
          %v1453 = vmul.f32 %v1232, -0.0012755102
          %v1454 = vmul.f32 %v1234, -0.0012755102
          %v1455 = vmul.f32 %v1236, -0.0012755102
          %v1456 = vmul.f32 %v1240, -0.0012755102
          %v1457 = vmul.f32 %v1242, -0.0012755102
          %v1458 = vmul.f32 %v1244, -0.0012755102
          %v1459 = vmul.f32 %v1246, -0.0012755102
          %v1460 = vmul.f32 %v1250, -0.0012755102
          %v1461 = vmul.f32 %v1252, -0.0012755102
          %v1462 = vmul.f32 %v1254, -0.0012755102
          %v1463 = vmul.f32 %v1256, -0.0012755102
          %v1464 = vmul.f32 %v1260, -0.0012755102
          %v1465 = vmul.f32 %v1262, -0.0012755102
          %v1466 = vmul.f32 %v1264, -0.0012755102
          %v1467 = vmul.f32 %v1266, -0.0012755102
          %v1468 = vmul.f32 %v1270, -0.0012755102
          %v1469 = vmul.f32 %v1272, -0.0012755102
          %v1470 = vmul.f32 %v1274, -0.0012755102
          %v1471 = vmul.f32 %v1276, -0.0012755102
          %v1472 = vmul.f32 %v1280, -0.0012755102
          %v1473 = vmul.f32 %v1282, -0.0012755102
          %v1474 = vmul.f32 %v1284, -0.0012755102
          %v1475 = vmul.f32 %v1286, -0.0012755102
          %v1476 = vmul.f32 %v1290, -0.0012755102
          %v1477 = vmul.f32 %v1292, -0.0012755102
          %v1478 = vmul.f32 %v1294, -0.0012755102
          %v1479 = vmul.f32 %v1296, -0.0012755102
          %v1480 = vmul.f32 %v1300, -0.0012755102
          %v1481 = vmul.f32 %v1302, -0.0012755102
          %v1482 = vmul.f32 %v1304, -0.0012755102
          %v1483 = vmul.f32 %v1306, -0.0012755102
          %v1484 = vmul.f32 %v1310, -0.0012755102
          %v1485 = vmul.f32 %v1312, -0.0012755102
          %v1486 = vmul.f32 %v1314, -0.0012755102
          %v1487 = vmul.f32 %v1316, -0.0012755102
          %v1488 = vmul.f32 %v1320, -0.0012755102
          %v1489 = vmul.f32 %v1322, -0.0012755102
          %v1490 = vmul.f32 %v1324, -0.0012755102
          %v1491 = vmul.f32 %v1326, -0.0012755102
          %v1492 = vmul.f32 %v1330, -0.0012755102
          %v1493 = vmul.f32 %v1332, -0.0012755102
          %v1494 = vmul.f32 %v1334, -0.0012755102
          %v1495 = vmul.f32 %v1336, -0.0012755102
          %v1496 = vmul.f32 %v1340, -0.0012755102
          %v1497 = vmul.f32 %v1342, -0.0012755102
          %v1498 = vmul.f32 %v1344, -0.0012755102
          %v1499 = vmul.f32 %v1346, -0.0012755102
          %v1500 = vmul.f32 %v1350, -0.0012755102
          %v1501 = vmul.f32 %v1352, -0.0012755102
          %v1502 = vmul.f32 %v1354, -0.0012755102
          %v1503 = vmul.f32 %v1356, -0.0012755102
          %v1504 = vmul.f32 %v1360, -0.0012755102
          %v1505 = vmul.f32 %v1362, -0.0012755102
          %v1506 = vmul.f32 %v1364, -0.0012755102
          %v1507 = vmul.f32 %v1366, -0.0012755102
          %v1508 = vmul.f32 %v1370, -0.0012755102
          %v1509 = vmul.f32 %v1372, -0.0012755102
          %v1510 = vmul.f32 %v1374, -0.0012755102
          %v1511 = vmul.f32 %v1376, -0.0012755102
          %v1512 = vmul.f32 %v1380, -0.0012755102
          %v1513 = vmul.f32 %v1382, -0.0012755102
          %v1514 = vmul.f32 %v1384, -0.0012755102
          %v1515 = vmul.f32 %v1386, -0.0012755102
          %v1516 = vadd.f32 %v1388, %v1452
          %v1517 = vadd.f32 %v1389, %v1453
          %v1518 = vadd.f32 %v1390, %v1454
          %v1519 = vadd.f32 %v1391, %v1455
          %v1520 = vadd.f32 %v1392, %v1456
          %v1521 = vadd.f32 %v1393, %v1457
          %v1522 = vadd.f32 %v1394, %v1458
          %v1523 = vadd.f32 %v1395, %v1459
          %v1524 = vadd.f32 %v1396, %v1460
          %v1525 = vadd.f32 %v1397, %v1461
          %v1526 = vadd.f32 %v1398, %v1462
          %v1527 = vadd.f32 %v1399, %v1463
          %v1528 = vadd.f32 %v1400, %v1464
          %v1529 = vadd.f32 %v1401, %v1465
          %v1530 = vadd.f32 %v1402, %v1466
          %v1531 = vadd.f32 %v1403, %v1467
          %v1532 = vadd.f32 %v1404, %v1468
          %v1533 = vadd.f32 %v1405, %v1469
          %v1534 = vadd.f32 %v1406, %v1470
          %v1535 = vadd.f32 %v1407, %v1471
          %v1536 = vadd.f32 %v1408, %v1472
          %v1537 = vadd.f32 %v1409, %v1473
          %v1538 = vadd.f32 %v1410, %v1474
          %v1539 = vadd.f32 %v1411, %v1475
          %v1540 = vadd.f32 %v1412, %v1476
          %v1541 = vadd.f32 %v1413, %v1477
          %v1542 = vadd.f32 %v1414, %v1478
          %v1543 = vadd.f32 %v1415, %v1479
          %v1544 = vadd.f32 %v1416, %v1480
          %v1545 = vadd.f32 %v1417, %v1481
          %v1546 = vadd.f32 %v1418, %v1482
          %v1547 = vadd.f32 %v1419, %v1483
          %v1548 = vadd.f32 %v1420, %v1484
          %v1549 = vadd.f32 %v1421, %v1485
          %v1550 = vadd.f32 %v1422, %v1486
          %v1551 = vadd.f32 %v1423, %v1487
          %v1552 = vadd.f32 %v1424, %v1488
          %v1553 = vadd.f32 %v1425, %v1489
          %v1554 = vadd.f32 %v1426, %v1490
          %v1555 = vadd.f32 %v1427, %v1491
          %v1556 = vadd.f32 %v1428, %v1492
          %v1557 = vadd.f32 %v1429, %v1493
          %v1558 = vadd.f32 %v1430, %v1494
          %v1559 = vadd.f32 %v1431, %v1495
          %v1560 = vadd.f32 %v1432, %v1496
          %v1561 = vadd.f32 %v1433, %v1497
          %v1562 = vadd.f32 %v1434, %v1498
          %v1563 = vadd.f32 %v1435, %v1499
          %v1564 = vadd.f32 %v1436, %v1500
          %v1565 = vadd.f32 %v1437, %v1501
          %v1566 = vadd.f32 %v1438, %v1502
          %v1567 = vadd.f32 %v1439, %v1503
          %v1568 = vadd.f32 %v1440, %v1504
          %v1569 = vadd.f32 %v1441, %v1505
          %v1570 = vadd.f32 %v1442, %v1506
          %v1571 = vadd.f32 %v1443, %v1507
          %v1572 = vadd.f32 %v1444, %v1508
          %v1573 = vadd.f32 %v1445, %v1509
          %v1574 = vadd.f32 %v1446, %v1510
          %v1575 = vadd.f32 %v1447, %v1511
          %v1576 = vadd.f32 %v1448, %v1512
          %v1577 = vadd.f32 %v1449, %v1513
          %v1578 = vadd.f32 %v1450, %v1514
          %v1579 = vadd.f32 %v1451, %v1515
          %1580 = vst [vmem:[%s413] sm:$0xff] %v1516
          %1581 = vst [vmem:[%s413 + $0x8] sm:$0xff] %v1517
          %1582 = vst [vmem:[%s413 + $0x10] sm:$0xff] %v1518
          %1583 = vst [vmem:[%s413 + $0x18] sm:$0xff] %v1519
          %1584 = vst [vmem:[%s413 + $0x20] sm:$0xff] %v1520
          %1585 = vst [vmem:[%s413 + $0x28] sm:$0xff] %v1521
          %1586 = vst [vmem:[%s413 + $0x30] sm:$0xff] %v1522
          %1587 = vst [vmem:[%s413 + $0x38] sm:$0xff] %v1523
          %1588 = vst [vmem:[%s413 + $0x40] sm:$0xff] %v1524
          %1589 = vst [vmem:[%s413 + $0x48] sm:$0xff] %v1525
          %1590 = vst [vmem:[%s413 + $0x50] sm:$0xff] %v1526
          %1591 = vst [vmem:[%s413 + $0x58] sm:$0xff] %v1527
          %1592 = vst [vmem:[%s413 + $0x60] sm:$0xff] %v1528
          %1593 = vst [vmem:[%s413 + $0x68] sm:$0xff] %v1529
          %1594 = vst [vmem:[%s413 + $0x70] sm:$0xff] %v1530
          %1595 = vst [vmem:[%s413 + $0x78] sm:$0xff] %v1531
          %1596 = vst [vmem:[%s413 + $0x80] sm:$0xff] %v1532
          %1597 = vst [vmem:[%s413 + $0x88] sm:$0xff] %v1533
          %1598 = vst [vmem:[%s413 + $0x90] sm:$0xff] %v1534
          %1599 = vst [vmem:[%s413 + $0x98] sm:$0xff] %v1535
          %1600 = vst [vmem:[%s413 + $0xa0] sm:$0xff] %v1536
          %1601 = vst [vmem:[%s413 + $0xa8] sm:$0xff] %v1537
          %1602 = vst [vmem:[%s413 + $0xb0] sm:$0xff] %v1538
          %1603 = vst [vmem:[%s413 + $0xb8] sm:$0xff] %v1539
          %1604 = vst [vmem:[%s413 + $0xc0] sm:$0xff] %v1540
          %1605 = vst [vmem:[%s413 + $0xc8] sm:$0xff] %v1541
          %1606 = vst [vmem:[%s413 + $0xd0] sm:$0xff] %v1542
          %1607 = vst [vmem:[%s413 + $0xd8] sm:$0xff] %v1543
          %1608 = vst [vmem:[%s413 + $0xe0] sm:$0xff] %v1544
          %1609 = vst [vmem:[%s413 + $0xe8] sm:$0xff] %v1545
          %1610 = vst [vmem:[%s413 + $0xf0] sm:$0xff] %v1546
          %1611 = vst [vmem:[%s413 + $0xf8] sm:$0xff] %v1547
          %1612 = vst [vmem:[%s413 + $0x100] sm:$0xff] %v1548
          %1613 = vst [vmem:[%s413 + $0x108] sm:$0xff] %v1549
          %1614 = vst [vmem:[%s413 + $0x110] sm:$0xff] %v1550
          %1615 = vst [vmem:[%s413 + $0x118] sm:$0xff] %v1551
          %1616 = vst [vmem:[%s413 + $0x120] sm:$0xff] %v1552
          %1617 = vst [vmem:[%s413 + $0x128] sm:$0xff] %v1553
          %1618 = vst [vmem:[%s413 + $0x130] sm:$0xff] %v1554
          %1619 = vst [vmem:[%s413 + $0x138] sm:$0xff] %v1555
          %1620 = vst [vmem:[%s413 + $0x140] sm:$0xff] %v1556
          %1621 = vst [vmem:[%s413 + $0x148] sm:$0xff] %v1557
          %1622 = vst [vmem:[%s413 + $0x150] sm:$0xff] %v1558
          %1623 = vst [vmem:[%s413 + $0x158] sm:$0xff] %v1559
          %1624 = vst [vmem:[%s413 + $0x160] sm:$0xff] %v1560
          %1625 = vst [vmem:[%s413 + $0x168] sm:$0xff] %v1561
          %1626 = vst [vmem:[%s413 + $0x170] sm:$0xff] %v1562
          %1627 = vst [vmem:[%s413 + $0x178] sm:$0xff] %v1563
          %1628 = vst [vmem:[%s413 + $0x180] sm:$0xff] %v1564
          %1629 = vst [vmem:[%s413 + $0x188] sm:$0xff] %v1565
          %1630 = vst [vmem:[%s413 + $0x190] sm:$0xff] %v1566
          %1631 = vst [vmem:[%s413 + $0x198] sm:$0xff] %v1567
          %1632 = vst [vmem:[%s413 + $0x1a0] sm:$0xff] %v1568
          %1633 = vst [vmem:[%s413 + $0x1a8] sm:$0xff] %v1569
          %1634 = vst [vmem:[%s413 + $0x1b0] sm:$0xff] %v1570
          %1635 = vst [vmem:[%s413 + $0x1b8] sm:$0xff] %v1571
          %1636 = vst [vmem:[%s413 + $0x1c0] sm:$0xff] %v1572
          %1637 = vst [vmem:[%s413 + $0x1c8] sm:$0xff] %v1573
          %1638 = vst [vmem:[%s413 + $0x1d0] sm:$0xff] %v1574
          %1639 = vst [vmem:[%s413 + $0x1d8] sm:$0xff] %v1575
          %1640 = vst [vmem:[%s413 + $0x1e0] sm:$0xff] %v1576
          %1641 = vst [vmem:[%s413 + $0x1e8] sm:$0xff] %v1577
          %1642 = vst [vmem:[%s413 + $0x1f0] sm:$0xff] %v1578
          %1643 = vst [vmem:[%s413 + $0x1f8] sm:$0xff] %v1579
        $region77: #{extract_patches_rec_style_gram.1} parent=64 // pred_fallthru
          _
        // Predicated region
        $region78: #{extract_patches_rec_style_gram.1} parent=64 // pred_check
          %p1644 = pneg %p415
        $region79: #{extract_patches_rec_style_gram.1} parent=64 // pred_check_branch
          %1646 = sbr.rel (%p1644) target = $region81
        $region80: #{extract_patches_rec_style_gram.1} parent=64 // pred_region
          %v1647 = vld [vmem:[%s413] sm:$0xff]
          %v1648 = vld [vmem:[%s413 + $0x8] sm:$0xff]
          %v1649 = vld [vmem:[%s413 + $0x10] sm:$0xff]
          %v1650 = vld [vmem:[%s413 + $0x18] sm:$0xff]
          %v1651 = vld [vmem:[%s413 + $0x20] sm:$0xff]
          %v1652 = vld [vmem:[%s413 + $0x28] sm:$0xff]
          %v1653 = vld [vmem:[%s413 + $0x30] sm:$0xff]
          %v1654 = vld [vmem:[%s413 + $0x38] sm:$0xff]
          %v1655 = vld [vmem:[%s413 + $0x40] sm:$0xff]
          %v1656 = vld [vmem:[%s413 + $0x48] sm:$0xff]
          %v1657 = vld [vmem:[%s413 + $0x50] sm:$0xff]
          %v1658 = vld [vmem:[%s413 + $0x58] sm:$0xff]
          %v1659 = vld [vmem:[%s413 + $0x60] sm:$0xff]
          %v1660 = vld [vmem:[%s413 + $0x68] sm:$0xff]
          %v1661 = vld [vmem:[%s413 + $0x70] sm:$0xff]
          %v1662 = vld [vmem:[%s413 + $0x78] sm:$0xff]
          %v1663 = vld [vmem:[%s413 + $0x80] sm:$0xff]
          %v1664 = vld [vmem:[%s413 + $0x88] sm:$0xff]
          %v1665 = vld [vmem:[%s413 + $0x90] sm:$0xff]
          %v1666 = vld [vmem:[%s413 + $0x98] sm:$0xff]
          %v1667 = vld [vmem:[%s413 + $0xa0] sm:$0xff]
          %v1668 = vld [vmem:[%s413 + $0xa8] sm:$0xff]
          %v1669 = vld [vmem:[%s413 + $0xb0] sm:$0xff]
          %v1670 = vld [vmem:[%s413 + $0xb8] sm:$0xff]
          %v1671 = vld [vmem:[%s413 + $0xc0] sm:$0xff]
          %v1672 = vld [vmem:[%s413 + $0xc8] sm:$0xff]
          %v1673 = vld [vmem:[%s413 + $0xd0] sm:$0xff]
          %v1674 = vld [vmem:[%s413 + $0xd8] sm:$0xff]
          %v1675 = vld [vmem:[%s413 + $0xe0] sm:$0xff]
          %v1676 = vld [vmem:[%s413 + $0xe8] sm:$0xff]
          %v1677 = vld [vmem:[%s413 + $0xf0] sm:$0xff]
          %v1678 = vld [vmem:[%s413 + $0xf8] sm:$0xff]
          %v1679 = vld [vmem:[%s413 + $0x100] sm:$0xff]
          %v1680 = vld [vmem:[%s413 + $0x108] sm:$0xff]
          %v1681 = vld [vmem:[%s413 + $0x110] sm:$0xff]
          %v1682 = vld [vmem:[%s413 + $0x118] sm:$0xff]
          %v1683 = vld [vmem:[%s413 + $0x120] sm:$0xff]
          %v1684 = vld [vmem:[%s413 + $0x128] sm:$0xff]
          %v1685 = vld [vmem:[%s413 + $0x130] sm:$0xff]
          %v1686 = vld [vmem:[%s413 + $0x138] sm:$0xff]
          %v1687 = vld [vmem:[%s413 + $0x140] sm:$0xff]
          %v1688 = vld [vmem:[%s413 + $0x148] sm:$0xff]
          %v1689 = vld [vmem:[%s413 + $0x150] sm:$0xff]
          %v1690 = vld [vmem:[%s413 + $0x158] sm:$0xff]
          %v1691 = vld [vmem:[%s413 + $0x160] sm:$0xff]
          %v1692 = vld [vmem:[%s413 + $0x168] sm:$0xff]
          %v1693 = vld [vmem:[%s413 + $0x170] sm:$0xff]
          %v1694 = vld [vmem:[%s413 + $0x178] sm:$0xff]
          %v1695 = vld [vmem:[%s413 + $0x180] sm:$0xff]
          %v1696 = vld [vmem:[%s413 + $0x188] sm:$0xff]
          %v1697 = vld [vmem:[%s413 + $0x190] sm:$0xff]
          %v1698 = vld [vmem:[%s413 + $0x198] sm:$0xff]
          %v1699 = vld [vmem:[%s413 + $0x1a0] sm:$0xff]
          %v1700 = vld [vmem:[%s413 + $0x1a8] sm:$0xff]
          %v1701 = vld [vmem:[%s413 + $0x1b0] sm:$0xff]
          %v1702 = vld [vmem:[%s413 + $0x1b8] sm:$0xff]
          %v1703 = vld [vmem:[%s413 + $0x1c0] sm:$0xff]
          %v1704 = vld [vmem:[%s413 + $0x1c8] sm:$0xff]
          %v1705 = vld [vmem:[%s413 + $0x1d0] sm:$0xff]
          %v1706 = vld [vmem:[%s413 + $0x1d8] sm:$0xff]
          %v1707 = vld [vmem:[%s413 + $0x1e0] sm:$0xff]
          %v1708 = vld [vmem:[%s413 + $0x1e8] sm:$0xff]
          %v1709 = vld [vmem:[%s413 + $0x1f0] sm:$0xff]
          %v1710 = vld [vmem:[%s413 + $0x1f8] sm:$0xff]
          %v1711 = vadd.f32 %v1647, %v1649
          %v1712 = vadd.f32 %v1711, %v1651
          %v1713 = vadd.f32 %v1712, %v1653
          %v1714 = vadd.f32 %v1713, %v1655
          %v1715 = vadd.f32 %v1714, %v1657
          %v1716 = vadd.f32 %v1715, %v1659
          %v1717 = vadd.f32 %v1716, %v1661
          %v1718 = vadd.f32 %v1717, %v1663
          %v1719 = vadd.f32 %v1718, %v1665
          %v1720 = vadd.f32 %v1719, %v1667
          %v1721 = vadd.f32 %v1720, %v1669
          %v1722 = vadd.f32 %v1721, %v1671
          %v1723 = vadd.f32 %v1722, %v1673
          %v1724 = vadd.f32 %v1723, %v1675
          %v1725 = vadd.f32 %v1724, %v1677
          %v1726 = vadd.f32 %v1725, %v1679
          %v1727 = vadd.f32 %v1726, %v1681
          %v1728 = vadd.f32 %v1727, %v1683
          %v1729 = vadd.f32 %v1728, %v1685
          %v1730 = vadd.f32 %v1729, %v1687
          %v1731 = vadd.f32 %v1730, %v1689
          %v1732 = vadd.f32 %v1731, %v1691
          %v1733 = vadd.f32 %v1732, %v1693
          %v1734 = vadd.f32 %v1733, %v1695
          %v1735 = vadd.f32 %v1734, %v1697
          %v1736 = vadd.f32 %v1735, %v1699
          %v1737 = vadd.f32 %v1736, %v1701
          %v1738 = vadd.f32 %v1737, %v1703
          %v1739 = vadd.f32 %v1738, %v1705
          %v1740 = vadd.f32 %v1739, %v1707
          %v1741 = vadd.f32 %v1740, %v1709
          %v1742 = vrot.slane %v1741, 4
          %v1743 = vadd.f32 %v1741, %v1742
          %v1744 = vrot.slane %v1743, 2
          %v1745 = vadd.f32 %v1743, %v1744
          %v1746 = vrot.slane %v1745, 1
          %v1747 = vadd.f32 %v1745, %v1746
          %v1748 = vadd.f32 %v1648, %v1650
          %v1749 = vadd.f32 %v1748, %v1652
          %v1750 = vadd.f32 %v1749, %v1654
          %v1751 = vadd.f32 %v1750, %v1656
          %v1752 = vadd.f32 %v1751, %v1658
          %v1753 = vadd.f32 %v1752, %v1660
          %v1754 = vadd.f32 %v1753, %v1662
          %v1755 = vadd.f32 %v1754, %v1664
          %v1756 = vadd.f32 %v1755, %v1666
          %v1757 = vadd.f32 %v1756, %v1668
          %v1758 = vadd.f32 %v1757, %v1670
          %v1759 = vadd.f32 %v1758, %v1672
          %v1760 = vadd.f32 %v1759, %v1674
          %v1761 = vadd.f32 %v1760, %v1676
          %v1762 = vadd.f32 %v1761, %v1678
          %v1763 = vadd.f32 %v1762, %v1680
          %v1764 = vadd.f32 %v1763, %v1682
          %v1765 = vadd.f32 %v1764, %v1684
          %v1766 = vadd.f32 %v1765, %v1686
          %v1767 = vadd.f32 %v1766, %v1688
          %v1768 = vadd.f32 %v1767, %v1690
          %v1769 = vadd.f32 %v1768, %v1692
          %v1770 = vadd.f32 %v1769, %v1694
          %v1771 = vadd.f32 %v1770, %v1696
          %v1772 = vadd.f32 %v1771, %v1698
          %v1773 = vadd.f32 %v1772, %v1700
          %v1774 = vadd.f32 %v1773, %v1702
          %v1775 = vadd.f32 %v1774, %v1704
          %v1776 = vadd.f32 %v1775, %v1706
          %v1777 = vadd.f32 %v1776, %v1708
          %v1778 = vadd.f32 %v1777, %v1710
          %v1779 = vrot.slane %v1778, 4
          %v1780 = vadd.f32 %v1778, %v1779
          %v1781 = vrot.slane %v1780, 2
          %v1782 = vadd.f32 %v1780, %v1781
          %v1783 = vrot.slane %v1782, 1
          %v1784 = vadd.f32 %v1782, %v1783
          %v1785 = vmul.f32 %v1747, 0.0051020407
          %v1786 = vmul.f32 %v1784, 0.0051020407
          %v1787 = vadd.f32 %v1647, %v1648
          %1788 = vadd.xlane.f32.xlu0 %v1787
          %v1789 = vpop.xlane.xlu0 %1788
          %v1790 = vadd.f32 %v1649, %v1650
          %1791 = vadd.xlane.f32.xlu0 %v1790
          %v1792 = vpop.xlane.xlu0 %1791
          %v1793 = vadd.f32 %v1651, %v1652
          %1794 = vadd.xlane.f32.xlu0 %v1793
          %v1795 = vpop.xlane.xlu0 %1794
          %v1796 = vadd.f32 %v1653, %v1654
          %1797 = vadd.xlane.f32.xlu0 %v1796
          %v1798 = vpop.xlane.xlu0 %1797
          %v1799 = vadd.f32 %v1655, %v1656
          %1800 = vadd.xlane.f32.xlu0 %v1799
          %v1801 = vpop.xlane.xlu0 %1800
          %v1802 = vadd.f32 %v1657, %v1658
          %1803 = vadd.xlane.f32.xlu0 %v1802
          %v1804 = vpop.xlane.xlu0 %1803
          %v1805 = vadd.f32 %v1659, %v1660
          %1806 = vadd.xlane.f32.xlu0 %v1805
          %v1807 = vpop.xlane.xlu0 %1806
          %v1808 = vadd.f32 %v1661, %v1662
          %1809 = vadd.xlane.f32.xlu0 %v1808
          %v1810 = vpop.xlane.xlu0 %1809
          %v1811 = vadd.f32 %v1663, %v1664
          %1812 = vadd.xlane.f32.xlu0 %v1811
          %v1813 = vpop.xlane.xlu0 %1812
          %v1814 = vadd.f32 %v1665, %v1666
          %1815 = vadd.xlane.f32.xlu0 %v1814
          %v1816 = vpop.xlane.xlu0 %1815
          %v1817 = vadd.f32 %v1667, %v1668
          %1818 = vadd.xlane.f32.xlu0 %v1817
          %v1819 = vpop.xlane.xlu0 %1818
          %v1820 = vadd.f32 %v1669, %v1670
          %1821 = vadd.xlane.f32.xlu0 %v1820
          %v1822 = vpop.xlane.xlu0 %1821
          %v1823 = vadd.f32 %v1671, %v1672
          %1824 = vadd.xlane.f32.xlu0 %v1823
          %v1825 = vpop.xlane.xlu0 %1824
          %v1826 = vadd.f32 %v1673, %v1674
          %1827 = vadd.xlane.f32.xlu0 %v1826
          %v1828 = vpop.xlane.xlu0 %1827
          %v1829 = vadd.f32 %v1675, %v1676
          %1830 = vadd.xlane.f32.xlu0 %v1829
          %v1831 = vpop.xlane.xlu0 %1830
          %v1832 = vadd.f32 %v1677, %v1678
          %1833 = vadd.xlane.f32.xlu0 %v1832
          %v1834 = vpop.xlane.xlu0 %1833
          %v1835 = vadd.f32 %v1679, %v1680
          %1836 = vadd.xlane.f32.xlu0 %v1835
          %v1837 = vpop.xlane.xlu0 %1836
          %v1838 = vadd.f32 %v1681, %v1682
          %1839 = vadd.xlane.f32.xlu0 %v1838
          %v1840 = vpop.xlane.xlu0 %1839
          %v1841 = vadd.f32 %v1683, %v1684
          %1842 = vadd.xlane.f32.xlu0 %v1841
          %v1843 = vpop.xlane.xlu0 %1842
          %v1844 = vadd.f32 %v1685, %v1686
          %1845 = vadd.xlane.f32.xlu0 %v1844
          %v1846 = vpop.xlane.xlu0 %1845
          %v1847 = vadd.f32 %v1687, %v1688
          %1848 = vadd.xlane.f32.xlu0 %v1847
          %v1849 = vpop.xlane.xlu0 %1848
          %v1850 = vadd.f32 %v1689, %v1690
          %1851 = vadd.xlane.f32.xlu0 %v1850
          %v1852 = vpop.xlane.xlu0 %1851
          %v1853 = vadd.f32 %v1691, %v1692
          %1854 = vadd.xlane.f32.xlu0 %v1853
          %v1855 = vpop.xlane.xlu0 %1854
          %v1856 = vadd.f32 %v1693, %v1694
          %1857 = vadd.xlane.f32.xlu0 %v1856
          %v1858 = vpop.xlane.xlu0 %1857
          %v1859 = vadd.f32 %v1695, %v1696
          %1860 = vadd.xlane.f32.xlu0 %v1859
          %v1861 = vpop.xlane.xlu0 %1860
          %v1862 = vadd.f32 %v1697, %v1698
          %1863 = vadd.xlane.f32.xlu0 %v1862
          %v1864 = vpop.xlane.xlu0 %1863
          %v1865 = vadd.f32 %v1699, %v1700
          %1866 = vadd.xlane.f32.xlu0 %v1865
          %v1867 = vpop.xlane.xlu0 %1866
          %v1868 = vadd.f32 %v1701, %v1702
          %1869 = vadd.xlane.f32.xlu0 %v1868
          %v1870 = vpop.xlane.xlu0 %1869
          %v1871 = vadd.f32 %v1703, %v1704
          %1872 = vadd.xlane.f32.xlu0 %v1871
          %v1873 = vpop.xlane.xlu0 %1872
          %v1874 = vadd.f32 %v1705, %v1706
          %1875 = vadd.xlane.f32.xlu0 %v1874
          %v1876 = vpop.xlane.xlu0 %1875
          %v1877 = vadd.f32 %v1707, %v1708
          %1878 = vadd.xlane.f32.xlu0 %v1877
          %v1879 = vpop.xlane.xlu0 %1878
          %v1880 = vadd.f32 %v1709, %v1710
          %1881 = vadd.xlane.f32.xlu0 %v1880
          %v1882 = vpop.xlane.xlu0 %1881
          %v1883 = vmul.f32 %v1789, 0.0051020407
          %v1884 = vmul.f32 %v1792, 0.0051020407
          %v1885 = vmul.f32 %v1795, 0.0051020407
          %v1886 = vmul.f32 %v1798, 0.0051020407
          %v1887 = vmul.f32 %v1801, 0.0051020407
          %v1888 = vmul.f32 %v1804, 0.0051020407
          %v1889 = vmul.f32 %v1807, 0.0051020407
          %v1890 = vmul.f32 %v1810, 0.0051020407
          %v1891 = vmul.f32 %v1813, 0.0051020407
          %v1892 = vmul.f32 %v1816, 0.0051020407
          %v1893 = vmul.f32 %v1819, 0.0051020407
          %v1894 = vmul.f32 %v1822, 0.0051020407
          %v1895 = vmul.f32 %v1825, 0.0051020407
          %v1896 = vmul.f32 %v1828, 0.0051020407
          %v1897 = vmul.f32 %v1831, 0.0051020407
          %v1898 = vmul.f32 %v1834, 0.0051020407
          %v1899 = vmul.f32 %v1837, 0.0051020407
          %v1900 = vmul.f32 %v1840, 0.0051020407
          %v1901 = vmul.f32 %v1843, 0.0051020407
          %v1902 = vmul.f32 %v1846, 0.0051020407
          %v1903 = vmul.f32 %v1849, 0.0051020407
          %v1904 = vmul.f32 %v1852, 0.0051020407
          %v1905 = vmul.f32 %v1855, 0.0051020407
          %v1906 = vmul.f32 %v1858, 0.0051020407
          %v1907 = vmul.f32 %v1861, 0.0051020407
          %v1908 = vmul.f32 %v1864, 0.0051020407
          %v1909 = vmul.f32 %v1867, 0.0051020407
          %v1910 = vmul.f32 %v1870, 0.0051020407
          %v1911 = vmul.f32 %v1873, 0.0051020407
          %v1912 = vmul.f32 %v1876, 0.0051020407
          %v1913 = vmul.f32 %v1879, 0.0051020407
          %v1914 = vmul.f32 %v1882, 0.0051020407
          %v1915 = vadd.f32 %v1785, %v1786
          %1916 = vadd.xlane.f32.xlu0 %v1915
          %v1917 = vpop.xlane.xlu0 %1916
          %v1918 = vmul.f32 %v1917, 0.0051020407
          %v1919 = vsub.f32 %v1647, %v1785
          %v1920 = vsub.f32 %v1648, %v1786
          %v1921 = vsub.f32 %v1649, %v1785
          %v1922 = vsub.f32 %v1650, %v1786
          %v1923 = vsub.f32 %v1651, %v1785
          %v1924 = vsub.f32 %v1652, %v1786
          %v1925 = vsub.f32 %v1653, %v1785
          %v1926 = vsub.f32 %v1654, %v1786
          %v1927 = vsub.f32 %v1655, %v1785
          %v1928 = vsub.f32 %v1656, %v1786
          %v1929 = vsub.f32 %v1657, %v1785
          %v1930 = vsub.f32 %v1658, %v1786
          %v1931 = vsub.f32 %v1659, %v1785
          %v1932 = vsub.f32 %v1660, %v1786
          %v1933 = vsub.f32 %v1661, %v1785
          %v1934 = vsub.f32 %v1662, %v1786
          %v1935 = vsub.f32 %v1663, %v1785
          %v1936 = vsub.f32 %v1664, %v1786
          %v1937 = vsub.f32 %v1665, %v1785
          %v1938 = vsub.f32 %v1666, %v1786
          %v1939 = vsub.f32 %v1667, %v1785
          %v1940 = vsub.f32 %v1668, %v1786
          %v1941 = vsub.f32 %v1669, %v1785
          %v1942 = vsub.f32 %v1670, %v1786
          %v1943 = vsub.f32 %v1671, %v1785
          %v1944 = vsub.f32 %v1672, %v1786
          %v1945 = vsub.f32 %v1673, %v1785
          %v1946 = vsub.f32 %v1674, %v1786
          %v1947 = vsub.f32 %v1675, %v1785
          %v1948 = vsub.f32 %v1676, %v1786
          %v1949 = vsub.f32 %v1677, %v1785
          %v1950 = vsub.f32 %v1678, %v1786
          %v1951 = vsub.f32 %v1679, %v1785
          %v1952 = vsub.f32 %v1680, %v1786
          %v1953 = vsub.f32 %v1681, %v1785
          %v1954 = vsub.f32 %v1682, %v1786
          %v1955 = vsub.f32 %v1683, %v1785
          %v1956 = vsub.f32 %v1684, %v1786
          %v1957 = vsub.f32 %v1685, %v1785
          %v1958 = vsub.f32 %v1686, %v1786
          %v1959 = vsub.f32 %v1687, %v1785
          %v1960 = vsub.f32 %v1688, %v1786
          %v1961 = vsub.f32 %v1689, %v1785
          %v1962 = vsub.f32 %v1690, %v1786
          %v1963 = vsub.f32 %v1691, %v1785
          %v1964 = vsub.f32 %v1692, %v1786
          %v1965 = vsub.f32 %v1693, %v1785
          %v1966 = vsub.f32 %v1694, %v1786
          %v1967 = vsub.f32 %v1695, %v1785
          %v1968 = vsub.f32 %v1696, %v1786
          %v1969 = vsub.f32 %v1697, %v1785
          %v1970 = vsub.f32 %v1698, %v1786
          %v1971 = vsub.f32 %v1699, %v1785
          %v1972 = vsub.f32 %v1700, %v1786
          %v1973 = vsub.f32 %v1701, %v1785
          %v1974 = vsub.f32 %v1702, %v1786
          %v1975 = vsub.f32 %v1703, %v1785
          %v1976 = vsub.f32 %v1704, %v1786
          %v1977 = vsub.f32 %v1705, %v1785
          %v1978 = vsub.f32 %v1706, %v1786
          %v1979 = vsub.f32 %v1707, %v1785
          %v1980 = vsub.f32 %v1708, %v1786
          %v1981 = vsub.f32 %v1709, %v1785
          %v1982 = vsub.f32 %v1710, %v1786
          %v1983 = vsub.f32 %v1919, %v1883
          %v1984 = vsub.f32 %v1920, %v1883
          %v1985 = vsub.f32 %v1921, %v1884
          %v1986 = vsub.f32 %v1922, %v1884
          %v1987 = vsub.f32 %v1923, %v1885
          %v1988 = vsub.f32 %v1924, %v1885
          %v1989 = vsub.f32 %v1925, %v1886
          %v1990 = vsub.f32 %v1926, %v1886
          %v1991 = vsub.f32 %v1927, %v1887
          %v1992 = vsub.f32 %v1928, %v1887
          %v1993 = vsub.f32 %v1929, %v1888
          %v1994 = vsub.f32 %v1930, %v1888
          %v1995 = vsub.f32 %v1931, %v1889
          %v1996 = vsub.f32 %v1932, %v1889
          %v1997 = vsub.f32 %v1933, %v1890
          %v1998 = vsub.f32 %v1934, %v1890
          %v1999 = vsub.f32 %v1935, %v1891
          %v2000 = vsub.f32 %v1936, %v1891
          %v2001 = vsub.f32 %v1937, %v1892
          %v2002 = vsub.f32 %v1938, %v1892
          %v2003 = vsub.f32 %v1939, %v1893
          %v2004 = vsub.f32 %v1940, %v1893
          %v2005 = vsub.f32 %v1941, %v1894
          %v2006 = vsub.f32 %v1942, %v1894
          %v2007 = vsub.f32 %v1943, %v1895
          %v2008 = vsub.f32 %v1944, %v1895
          %v2009 = vsub.f32 %v1945, %v1896
          %v2010 = vsub.f32 %v1946, %v1896
          %v2011 = vsub.f32 %v1947, %v1897
          %v2012 = vsub.f32 %v1948, %v1897
          %v2013 = vsub.f32 %v1949, %v1898
          %v2014 = vsub.f32 %v1950, %v1898
          %v2015 = vsub.f32 %v1951, %v1899
          %v2016 = vsub.f32 %v1952, %v1899
          %v2017 = vsub.f32 %v1953, %v1900
          %v2018 = vsub.f32 %v1954, %v1900
          %v2019 = vsub.f32 %v1955, %v1901
          %v2020 = vsub.f32 %v1956, %v1901
          %v2021 = vsub.f32 %v1957, %v1902
          %v2022 = vsub.f32 %v1958, %v1902
          %v2023 = vsub.f32 %v1959, %v1903
          %v2024 = vsub.f32 %v1960, %v1903
          %v2025 = vsub.f32 %v1961, %v1904
          %v2026 = vsub.f32 %v1962, %v1904
          %v2027 = vsub.f32 %v1963, %v1905
          %v2028 = vsub.f32 %v1964, %v1905
          %v2029 = vsub.f32 %v1965, %v1906
          %v2030 = vsub.f32 %v1966, %v1906
          %v2031 = vsub.f32 %v1967, %v1907
          %v2032 = vsub.f32 %v1968, %v1907
          %v2033 = vsub.f32 %v1969, %v1908
          %v2034 = vsub.f32 %v1970, %v1908
          %v2035 = vsub.f32 %v1971, %v1909
          %v2036 = vsub.f32 %v1972, %v1909
          %v2037 = vsub.f32 %v1973, %v1910
          %v2038 = vsub.f32 %v1974, %v1910
          %v2039 = vsub.f32 %v1975, %v1911
          %v2040 = vsub.f32 %v1976, %v1911
          %v2041 = vsub.f32 %v1977, %v1912
          %v2042 = vsub.f32 %v1978, %v1912
          %v2043 = vsub.f32 %v1979, %v1913
          %v2044 = vsub.f32 %v1980, %v1913
          %v2045 = vsub.f32 %v1981, %v1914
          %v2046 = vsub.f32 %v1982, %v1914
          %v2047 = vadd.f32 %v1983, %v1918
          %v2048 = vadd.f32 %v1984, %v1918
          %v2049 = vadd.f32 %v1985, %v1918
          %v2050 = vadd.f32 %v1986, %v1918
          %v2051 = vadd.f32 %v1987, %v1918
          %v2052 = vadd.f32 %v1988, %v1918
          %v2053 = vadd.f32 %v1989, %v1918
          %v2054 = vadd.f32 %v1990, %v1918
          %v2055 = vadd.f32 %v1991, %v1918
          %v2056 = vadd.f32 %v1992, %v1918
          %v2057 = vadd.f32 %v1993, %v1918
          %v2058 = vadd.f32 %v1994, %v1918
          %v2059 = vadd.f32 %v1995, %v1918
          %v2060 = vadd.f32 %v1996, %v1918
          %v2061 = vadd.f32 %v1997, %v1918
          %v2062 = vadd.f32 %v1998, %v1918
          %v2063 = vadd.f32 %v1999, %v1918
          %v2064 = vadd.f32 %v2000, %v1918
          %v2065 = vadd.f32 %v2001, %v1918
          %v2066 = vadd.f32 %v2002, %v1918
          %v2067 = vadd.f32 %v2003, %v1918
          %v2068 = vadd.f32 %v2004, %v1918
          %v2069 = vadd.f32 %v2005, %v1918
          %v2070 = vadd.f32 %v2006, %v1918
          %v2071 = vadd.f32 %v2007, %v1918
          %v2072 = vadd.f32 %v2008, %v1918
          %v2073 = vadd.f32 %v2009, %v1918
          %v2074 = vadd.f32 %v2010, %v1918
          %v2075 = vadd.f32 %v2011, %v1918
          %v2076 = vadd.f32 %v2012, %v1918
          %v2077 = vadd.f32 %v2013, %v1918
          %v2078 = vadd.f32 %v2014, %v1918
          %v2079 = vadd.f32 %v2015, %v1918
          %v2080 = vadd.f32 %v2016, %v1918
          %v2081 = vadd.f32 %v2017, %v1918
          %v2082 = vadd.f32 %v2018, %v1918
          %v2083 = vadd.f32 %v2019, %v1918
          %v2084 = vadd.f32 %v2020, %v1918
          %v2085 = vadd.f32 %v2021, %v1918
          %v2086 = vadd.f32 %v2022, %v1918
          %v2087 = vadd.f32 %v2023, %v1918
          %v2088 = vadd.f32 %v2024, %v1918
          %v2089 = vadd.f32 %v2025, %v1918
          %v2090 = vadd.f32 %v2026, %v1918
          %v2091 = vadd.f32 %v2027, %v1918
          %v2092 = vadd.f32 %v2028, %v1918
          %v2093 = vadd.f32 %v2029, %v1918
          %v2094 = vadd.f32 %v2030, %v1918
          %v2095 = vadd.f32 %v2031, %v1918
          %v2096 = vadd.f32 %v2032, %v1918
          %v2097 = vadd.f32 %v2033, %v1918
          %v2098 = vadd.f32 %v2034, %v1918
          %v2099 = vadd.f32 %v2035, %v1918
          %v2100 = vadd.f32 %v2036, %v1918
          %v2101 = vadd.f32 %v2037, %v1918
          %v2102 = vadd.f32 %v2038, %v1918
          %v2103 = vadd.f32 %v2039, %v1918
          %v2104 = vadd.f32 %v2040, %v1918
          %v2105 = vadd.f32 %v2041, %v1918
          %v2106 = vadd.f32 %v2042, %v1918
          %v2107 = vadd.f32 %v2043, %v1918
          %v2108 = vadd.f32 %v2044, %v1918
          %v2109 = vadd.f32 %v2045, %v1918
          %v2110 = vadd.f32 %v2046, %v1918
          %2111 = vst [vmem:[%s413] sm:$0xff] %v2047
          %2112 = vst [vmem:[%s413 + $0x8] sm:$0xff] %v2048
          %2113 = vst [vmem:[%s413 + $0x10] sm:$0xff] %v2049
          %2114 = vst [vmem:[%s413 + $0x18] sm:$0xff] %v2050
          %2115 = vst [vmem:[%s413 + $0x20] sm:$0xff] %v2051
          %2116 = vst [vmem:[%s413 + $0x28] sm:$0xff] %v2052
          %2117 = vst [vmem:[%s413 + $0x30] sm:$0xff] %v2053
          %2118 = vst [vmem:[%s413 + $0x38] sm:$0xff] %v2054
          %2119 = vst [vmem:[%s413 + $0x40] sm:$0xff] %v2055
          %2120 = vst [vmem:[%s413 + $0x48] sm:$0xff] %v2056
          %2121 = vst [vmem:[%s413 + $0x50] sm:$0xff] %v2057
          %2122 = vst [vmem:[%s413 + $0x58] sm:$0xff] %v2058
          %2123 = vst [vmem:[%s413 + $0x60] sm:$0xff] %v2059
          %2124 = vst [vmem:[%s413 + $0x68] sm:$0xff] %v2060
          %2125 = vst [vmem:[%s413 + $0x70] sm:$0xff] %v2061
          %2126 = vst [vmem:[%s413 + $0x78] sm:$0xff] %v2062
          %2127 = vst [vmem:[%s413 + $0x80] sm:$0xff] %v2063
          %2128 = vst [vmem:[%s413 + $0x88] sm:$0xff] %v2064
          %2129 = vst [vmem:[%s413 + $0x90] sm:$0xff] %v2065
          %2130 = vst [vmem:[%s413 + $0x98] sm:$0xff] %v2066
          %2131 = vst [vmem:[%s413 + $0xa0] sm:$0xff] %v2067
          %2132 = vst [vmem:[%s413 + $0xa8] sm:$0xff] %v2068
          %2133 = vst [vmem:[%s413 + $0xb0] sm:$0xff] %v2069
          %2134 = vst [vmem:[%s413 + $0xb8] sm:$0xff] %v2070
          %2135 = vst [vmem:[%s413 + $0xc0] sm:$0xff] %v2071
          %2136 = vst [vmem:[%s413 + $0xc8] sm:$0xff] %v2072
          %2137 = vst [vmem:[%s413 + $0xd0] sm:$0xff] %v2073
          %2138 = vst [vmem:[%s413 + $0xd8] sm:$0xff] %v2074
          %2139 = vst [vmem:[%s413 + $0xe0] sm:$0xff] %v2075
          %2140 = vst [vmem:[%s413 + $0xe8] sm:$0xff] %v2076
          %2141 = vst [vmem:[%s413 + $0xf0] sm:$0xff] %v2077
          %2142 = vst [vmem:[%s413 + $0xf8] sm:$0xff] %v2078
          %2143 = vst [vmem:[%s413 + $0x100] sm:$0xff] %v2079
          %2144 = vst [vmem:[%s413 + $0x108] sm:$0xff] %v2080
          %2145 = vst [vmem:[%s413 + $0x110] sm:$0xff] %v2081
          %2146 = vst [vmem:[%s413 + $0x118] sm:$0xff] %v2082
          %2147 = vst [vmem:[%s413 + $0x120] sm:$0xff] %v2083
          %2148 = vst [vmem:[%s413 + $0x128] sm:$0xff] %v2084
          %2149 = vst [vmem:[%s413 + $0x130] sm:$0xff] %v2085
          %2150 = vst [vmem:[%s413 + $0x138] sm:$0xff] %v2086
          %2151 = vst [vmem:[%s413 + $0x140] sm:$0xff] %v2087
          %2152 = vst [vmem:[%s413 + $0x148] sm:$0xff] %v2088
          %2153 = vst [vmem:[%s413 + $0x150] sm:$0xff] %v2089
          %2154 = vst [vmem:[%s413 + $0x158] sm:$0xff] %v2090
          %2155 = vst [vmem:[%s413 + $0x160] sm:$0xff] %v2091
          %2156 = vst [vmem:[%s413 + $0x168] sm:$0xff] %v2092
          %2157 = vst [vmem:[%s413 + $0x170] sm:$0xff] %v2093
          %2158 = vst [vmem:[%s413 + $0x178] sm:$0xff] %v2094
          %2159 = vst [vmem:[%s413 + $0x180] sm:$0xff] %v2095
          %2160 = vst [vmem:[%s413 + $0x188] sm:$0xff] %v2096
          %2161 = vst [vmem:[%s413 + $0x190] sm:$0xff] %v2097
          %2162 = vst [vmem:[%s413 + $0x198] sm:$0xff] %v2098
          %2163 = vst [vmem:[%s413 + $0x1a0] sm:$0xff] %v2099
          %2164 = vst [vmem:[%s413 + $0x1a8] sm:$0xff] %v2100
          %2165 = vst [vmem:[%s413 + $0x1b0] sm:$0xff] %v2101
          %2166 = vst [vmem:[%s413 + $0x1b8] sm:$0xff] %v2102
          %2167 = vst [vmem:[%s413 + $0x1c0] sm:$0xff] %v2103
          %2168 = vst [vmem:[%s413 + $0x1c8] sm:$0xff] %v2104
          %2169 = vst [vmem:[%s413 + $0x1d0] sm:$0xff] %v2105
          %2170 = vst [vmem:[%s413 + $0x1d8] sm:$0xff] %v2106
          %2171 = vst [vmem:[%s413 + $0x1e0] sm:$0xff] %v2107
          %2172 = vst [vmem:[%s413 + $0x1e8] sm:$0xff] %v2108
          %2173 = vst [vmem:[%s413 + $0x1f0] sm:$0xff] %v2109
          %2174 = vst [vmem:[%s413 + $0x1f8] sm:$0xff] %v2110
        $region81: #{extract_patches_rec_style_gram.1} parent=64 // pred_fallthru
          _
        %p2175 = scmp.lt.s32.totalorder %s18, 1
        %s2176 = scalar_select %p2175, %s18, 1
        %p2177 = scmp.lt.s32.totalorder %s19, 1
        %s2178 = scalar_select %p2177, %s19, 1
        %s2179 = smul.addr %s2178, 64
        %s2180 = smul.addr %s2176, 128
        %s2181 = sadd.s32 %s2179, %s2180
        %s2182 = smul.addr %s2181, 8
        %s2183 = scalar_lea.vmem %s2, %s2182
        // Predicated region
        $region82: #{extract_patches_rec_style_gram.1} parent=64 // pred_check
          %p2184 = pneg %p120
        $region83: #{extract_patches_rec_style_gram.1} parent=64 // pred_check_branch
          %2186 = sbr.rel (%p2184) target = $region85
        $region84: #{extract_patches_rec_style_gram.1} parent=64 // pred_region
          _
        $region85: #{extract_patches_rec_style_gram.1} parent=64 // pred_fallthru
          _
      $region65: #{extract_patches_rec_style_gram.1} parent=5 // pred_fallthru
        _
      %p2187 = scmp.le.s32.totalorder 2, %s8
      // Predicated region
      $region86: #{extract_patches_rec_style_gram.1} parent=5 // pred_check
        %p2188 = pneg %p2187
      $region87: #{extract_patches_rec_style_gram.1} parent=5 // pred_check_branch
        %2190 = sbr.rel (%p2188) target = $region89
      $region88: #{extract_patches_rec_style_gram.1} parent=5 // pred_region
        %s2191 = ssub.s32 %s8, 2
        // Predicated region
        $region90: #{extract_patches_rec_style_gram.1} parent=88 // pred_check
          %p2192 = pneg %p126
        $region91: #{extract_patches_rec_style_gram.1} parent=88 // pred_check_branch
          %2194 = sbr.rel (%p2192) target = $region93
        $region92: #{extract_patches_rec_style_gram.1} parent=88 // pred_region
          %p2195 = scmp.lt.s32.totalorder %s21, 1
          %s2196 = scalar_select %p2195, %s21, 1
          %p2197 = scmp.lt.s32.totalorder %s22, 1
          %s2198 = scalar_select %p2197, %s22, 1
          %s2199 = smul.addr %s2198, 64
          %s2200 = smul.addr %s2196, 128
          %s2201 = sadd.s32 %s2199, %s2200
          %s2202 = smul.addr %s2201, 8
          %s2203 = scalar_lea.vmem %s2, %s2202
        $region93: #{extract_patches_rec_style_gram.1} parent=88 // pred_fallthru
          _
      $region89: #{extract_patches_rec_style_gram.1} parent=5 // pred_fallthru
        _
    $region6: #{extract_patches_rec_style_gram.1} parent=1 // loop_footer
      %s12 = sadd.s32 1, %s8
    $region7: #{extract_patches_rec_style_gram.1} parent=1 // loop_footer_branch
      %7 = sbr.rel target = $region3
    $region8: #{extract_patches_rec_style_gram.1} parent=1 // loop_exit
      _

</llo_original>
